<compile_context>
chip_gen: v6e
topology: v6e:2x2x1
jax: 0.10.0
libtpu: 0.0.40
codegen_flags: <defaults>
</compile_context>

<pallas_src>
from functools import partial

import jax
import jax.numpy as jnp
from jax.experimental import pallas as pl
from jax.experimental.pallas import tpu as pltpu

ALPHA = 0.2          # cfg.model.gat_alpha (LeakyReLU negative slope)
MASK_VAL = -9e15     # -9000000000000000.0 in the reference


def gat_kernel(x_ref, wf_ref, ablk_ref, adj_ref, out_ref, *,
               n_graphs, n_heads, head_dim, matmul_dtype):
    G, N, _ = adj_ref.shape
    H, F = n_heads, head_dim

    # --- head-fused projection: one sublane-filling, 128-lane-wide matmul ----
    # x_ref is (G*N, Fin) in matmul_dtype (cast host-side); wf_ref is
    # (Fin, H*F) so hf_all[:, h*F:(h+1)*F] == x_g @ W_h.
    hf_all = jnp.dot(x_ref[...], wf_ref[...],
                     preferred_element_type=jnp.float32)            # (G*N, H*F)
    hf_mm = hf_all.astype(matmul_dtype)                             # one cast, reused

    # --- head-fused a1/a2: block-diagonal operand -> all f1/f2 in one dot ----
    f12_all = jnp.dot(hf_mm, ablk_ref[...],
                      preferred_element_type=jnp.float32)           # (G*N, 2H)
    f1_all = f12_all[:, 0:H]                                        # (G*N, H)
    # ONE XLU transpose per grid step (instead of H per graph).
    f2t_all = jnp.transpose(f12_all[:, H:2 * H], (1, 0))            # (H, G*N)

    graph_outs = []
    for g in range(n_graphs):                 # static unroll; n_graphs is small
        r0 = g * N
        # Mask hoisted out of the head loop as an additive bias.
        bias = jnp.where(adj_ref[g].astype(jnp.int32) > 0, 0.0, MASK_VAL)  # (N,N)

        head_outs = []
        for h in range(H):                    # static unroll; H is small
            f1 = f1_all[r0:r0 + N, h:h + 1]                         # (N, 1)
            f2 = f2t_all[h:h + 1, r0:r0 + N]                        # (1, N)
            e = f1 + f2                                             # (N, N)
            e = jnp.where(e > 0, e, ALPHA * e)                      # LeakyReLU
            att = e + bias                                          # masked logits

            # Numerically stable softmax with DEFERRED normalization: rows are
            # scaled after the attention matmul (N EUP reciprocals + N*F muls
            # instead of N*N divides). Self-loops keep every row non-empty so
            # the finite MASK_VAL matches the PyTorch reference exactly.
            rowmax = jnp.max(att, axis=-1, keepdims=True)           # (N, 1)
            p = jnp.exp(att - rowmax)                               # masked -> 0
            p_mm = p.astype(matmul_dtype)
            # rowsum from the quantized p actually used in the MXU matmul.
            rowsum = jnp.sum(p_mm.astype(jnp.float32), axis=-1, keepdims=True)

            # TODO(synk): F.dropout(attention, gat_dropout) skipped — eval mode
            # (training=False) makes it the identity.

            hf_h = hf_mm[r0:r0 + N, h * F:(h + 1) * F]              # (N, F)
            hp = jnp.dot(p_mm, hf_h, preferred_element_type=jnp.float32)
            hp = hp * pl.reciprocal(rowsum, approx=True)

            # concat=True -> ELU. Clamped exp so the unselected branch never
            # overflows. TODO(synk): expm1 would avoid cancellation near 0;
            # exp is kept for guaranteed Mosaic lowering (abs error ~1e-7).
            neg = jnp.exp(jnp.minimum(hp, 0.0)) - 1.0
            head_outs.append(jnp.where(hp > 0, hp, neg))

        graph_outs.append(jnp.concatenate(head_outs, axis=-1))      # (N, H*F)

    # Single lane-dense store for the whole block (H*F = 128 lanes by default).
    out_ref[...] = jnp.concatenate(graph_outs, axis=0)              # (G*N, H*F)


def gat_forward(x, W, a12, adj, *, matmul_dtype=jnp.bfloat16, batch_block=None):
    """Batched multi-head GAT forward.

    x:   (B, N, Fin) f32       W:   (H, Fin, Fout) f32
    a12: (H, Fout, 2) f32      adj: (B, N, N) int8 (>0 == edge)
    returns (B, N, H*Fout) f32

    matmul_dtype=bfloat16 (default) keeps f32 accumulation on the MXU via
    preferred_element_type; pass jnp.float32 for bit-tighter numerics.
    """
    B, N, Fin = x.shape
    H, _, F = W.shape

    if batch_block is None:
        # Fill sublanes per grid step but keep >= 2 grid steps so the
        # "parallel" batch axis can feed both TensorCores on v7x.
        batch_block = B // 2 if (B % 2 == 0 and B >= 2) else 1
    assert B % batch_block == 0, "batch_block must divide B"
    n_steps = B // batch_block

    # Host-side head fusion + dtype cast (no per-head casts inside the kernel).
    w_fused = jnp.transpose(W, (1, 0, 2)).reshape(Fin, H * F).astype(matmul_dtype)
    a1, a2 = a12[..., 0], a12[..., 1]                               # (H, F) each
    eye_h = jnp.eye(H, dtype=a12.dtype)
    blk1 = (a1[:, :, None] * eye_h[:, None, :]).reshape(H * F, H)   # block-diag a1
    blk2 = (a2[:, :, None] * eye_h[:, None, :]).reshape(H * F, H)   # block-diag a2
    a_blk = jnp.concatenate([blk1, blk2], axis=1).astype(matmul_dtype)  # (H*F, 2H)

    x2 = x.reshape(B * N, Fin).astype(matmul_dtype)                 # rows flattened

    kernel = partial(gat_kernel, n_graphs=batch_block, n_heads=H, head_dim=F,
                     matmul_dtype=matmul_dtype)

    # NOTE: for large graphs the (N, N) attention slab must be tiled over
    # query-row blocks (flash-style online softmax). That tiling is
    # generation-aware: v7x has half the VMEM of v5e/v6e (64 vs 128 MiB), so
    # target roughly half the row-tile there (e.g. Tq=256 vs 512) and raise
    # vmem_limit_bytes via CompilerParams. At this module's shapes a single
    # resident block per graph is optimal.
    out2 = pl.pallas_call(
        kernel,
        out_shape=jax.ShapeDtypeStruct((B * N, H * F), jnp.float32),
        grid=(n_steps,),
        in_specs=[
            pl.BlockSpec((batch_block * N, Fin), lambda b: (b, 0)),
            pl.BlockSpec((Fin, H * F), lambda b: (0, 0)),
            pl.BlockSpec((H * F, 2 * H), lambda b: (0, 0)),
            pl.BlockSpec((batch_block, N, N), lambda b: (b, 0, 0)),
        ],
        out_specs=pl.BlockSpec((batch_block * N, H * F), lambda b: (b, 0)),
        compiler_params=pltpu.CompilerParams(
            dimension_semantics=("parallel",)),   # batch axis -> both TCs on v7x
    )(x2, w_fused, a_blk, adj)
    return out2.reshape(B, N, H * F)


def _xavier_uniform(key, shape, gain=1.414):
    fan_in, fan_out = shape[0], shape[1]
    bound = gain * (6.0 / (fan_in + fan_out)) ** 0.5
    return jax.random.uniform(key, shape, jnp.float32, -bound, bound)


def _reference(x, W, a12, adj, matmul_dtype):
    # Pure-JAX mirror of the PyTorch forward (eval mode), per head, heads
    # concatenated along features. Operands are rounded to matmul_dtype exactly
    # as the kernel does so the comparison stays tight even in bf16 mode.
    f32 = jnp.float32
    hi = jax.lax.Precision.HIGHEST
    q = lambda v: v.astype(matmul_dtype).astype(f32)
    xq = q(x)
    outs = []
    for h in range(W.shape[0]):
        hf = jnp.einsum('bnf,fo->bno', xq, q(W[h]), precision=hi)
        hf_q = q(hf)
        f12 = jnp.einsum('bno,ot->bnt', hf_q, q(a12[h]), precision=hi)
        e = f12[..., 0:1] + jnp.swapaxes(f12[..., 1:2], -1, -2)
        e = jnp.where(e > 0, e, ALPHA * e)
        att = jnp.where(adj > 0, e, MASK_VAL)
        rowmax = jnp.max(att, axis=-1, keepdims=True)
        p_q = q(jnp.exp(att - rowmax))
        rowsum = jnp.sum(p_q, axis=-1, keepdims=True)
        hp = jnp.einsum('bij,bjo->bio', p_q, hf_q, precision=hi) / rowsum
        outs.append(jnp.where(hp > 0, hp, jnp.expm1(hp)))
    return jnp.concatenate(outs, axis=-1)


if __name__ == "__main__":
    # Module config: last=0, concat=True, h_dim=32 -> in_features=out_features=32
    B = 4          # independent graphs; batch_block=2 -> 2 grid steps
    N = 8          # number of graph nodes
    H_DIM = 32     # h_dim
    HEADS = 4      # cfg.model.h2o_gat_heads -> fused output width 4*32 = 128

    key = jax.random.PRNGKey(0)
    k_x, k_w, k_a, k_adj = jax.random.split(key, 4)

    x = jax.random.normal(k_x, (B, N, H_DIM), jnp.float32)

    w_keys = jax.random.split(k_w, HEADS)
    a_keys = jax.random.split(k_a, HEADS)
    W = jnp.stack([_xavier_uniform(w_keys[h], (H_DIM, H_DIM)) for h in range(HEADS)])
    # pack a = concat([a1, a2], axis=0) into (Fout, 2) per head
    a_full = [_xavier_uniform(a_keys[h], (2 * H_DIM, 1)) for h in range(HEADS)]
    a12 = jnp.stack([jnp.concatenate([a[:H_DIM], a[H_DIM:]], axis=1) for a in a_full])

    # adjacency: random 0/1 edges + self-loops, stored as int8
    adj = (jax.random.uniform(k_adj, (B, N, N)) > 0.5).astype(jnp.int8)
    adj = jnp.maximum(adj, jnp.eye(N, dtype=jnp.int8)[None, :, :])

    out = jax.jit(gat_forward)(x, W, a12, adj)
    out = jax.block_until_ready(out)

    ref = _reference(x, W, a12, adj, jnp.bfloat16)
    assert out.shape == (B, N, HEADS * H_DIM)
    # tolerance covers pl.reciprocal(approx=True), MXU vs XLA accumulation
    # order, and rare 1-ulp bf16 re-quantization differences of hf/p.
    assert jnp.allclose(out, ref, rtol=1e-2, atol=1e-2), "mismatch vs reference"

    print("KERNEL_OK")
</pallas_src>

<mosaic_0001>
module attributes {stable_mosaic.version = 11 : i64} {
  func.func @gat_kernel(%arg0: i32, %arg1: memref<16x32xbf16, #tpu.memory_space<vmem>>, %arg2: memref<32x128xbf16, #tpu.memory_space<vmem>>, %arg3: memref<128x8xbf16, #tpu.memory_space<vmem>>, %arg4: memref<2x8x8xi8, #tpu.memory_space<vmem>>, %arg5: memref<16x128xf32, #tpu.memory_space<vmem>>) attributes {dimension_semantics = [#tpu.dimension_semantics<parallel>], iteration_bounds = array<i64: 2>, scalar_prefetch = 0 : i64, scratch_operands = 0 : i64, tpu.core_type = #tpu.core_type<tc>, window_params = [{transform_indices = @transform_0, window_bounds = array<i64: 16, 32>}, {pipeline_mode = #tpu.pipeline_mode<synchronous>, transform_indices = @transform_1, window_bounds = array<i64: 32, 128>}, {pipeline_mode = #tpu.pipeline_mode<synchronous>, transform_indices = @transform_2, window_bounds = array<i64: 128, 8>}, {transform_indices = @transform_3, window_bounds = array<i64: 2, 8, 8>}, {transform_indices = @transform_4, window_bounds = array<i64: 16, 128>}]} {
    %c0 = arith.constant 0 : index
    %c0_0 = arith.constant 0 : index
    %0 = vector.load %arg1[%c0, %c0_0] : memref<16x32xbf16, #tpu.memory_space<vmem>>, vector<16x32xbf16>
    %c0_1 = arith.constant 0 : index
    %c0_2 = arith.constant 0 : index
    %1 = vector.load %arg2[%c0_1, %c0_2] : memref<32x128xbf16, #tpu.memory_space<vmem>>, vector<32x128xbf16>
    %cst = arith.constant dense<0.000000e+00> : vector<16x128xf32>
    %2 = tpu.matmul %0, %1, %cst {dimension_numbers = #tpu.dot_dimension_numbers<[1], [0], [0], [1], [0, 0, 1, 1], [], []>} : vector<16x32xbf16>, vector<32x128xbf16>, vector<16x128xf32> -> vector<16x128xf32>
    %3 = arith.truncf %2 : vector<16x128xf32> to vector<16x128xbf16>
    %c0_3 = arith.constant 0 : index
    %c0_4 = arith.constant 0 : index
    %4 = vector.load %arg3[%c0_3, %c0_4] : memref<128x8xbf16, #tpu.memory_space<vmem>>, vector<128x8xbf16>
    %cst_5 = arith.constant dense<0.000000e+00> : vector<16x8xf32>
    %5 = tpu.matmul %3, %4, %cst_5 {dimension_numbers = #tpu.dot_dimension_numbers<[1], [0], [0], [1], [0, 0, 1, 1], [], []>} : vector<16x128xbf16>, vector<128x8xbf16>, vector<16x8xf32> -> vector<16x8xf32>
    %6 = vector.extract_strided_slice %5 {offsets = [0, 0], sizes = [16, 4], strides = [1, 1]} : vector<16x8xf32> to vector<16x4xf32>
    %7 = vector.extract_strided_slice %5 {offsets = [0, 4], sizes = [16, 4], strides = [1, 1]} : vector<16x8xf32> to vector<16x4xf32>
    %8 = tpu.transpose %7, [1, 0] : vector<16x4xf32> -> vector<4x16xf32>
    %c0_6 = arith.constant 0 : index
    %c0_7 = arith.constant 0 : index
    %c0_8 = arith.constant 0 : index
    %9 = vector.load %arg4[%c0_6, %c0_7, %c0_8] : memref<2x8x8xi8, #tpu.memory_space<vmem>>, vector<1x8x8xi8>
    %10 = vector.shape_cast %9 : vector<1x8x8xi8> to vector<8x8xi8>
    %11 = arith.extsi %10 : vector<8x8xi8> to vector<8x8xi32>
    %c0_i32 = arith.constant 0 : i32
    %12 = vector.broadcast %c0_i32 : i32 to vector<8x8xi32>
    %13 = arith.cmpi sgt, %11, %12 : vector<8x8xi32>
    %cst_9 = arith.constant 0.000000e+00 : f32
    %cst_10 = arith.constant -9.000000e+15 : f32
    %14 = vector.broadcast %cst_9 : f32 to vector<8x8xf32>
    %15 = vector.broadcast %cst_10 : f32 to vector<8x8xf32>
    %16 = arith.select %13, %14, %15 : vector<8x8xi1>, vector<8x8xf32>
    %17 = vector.extract_strided_slice %6 {offsets = [0, 0], sizes = [8, 1], strides = [1, 1]} : vector<16x4xf32> to vector<8x1xf32>
    %18 = vector.extract_strided_slice %8 {offsets = [0, 0], sizes = [1, 8], strides = [1, 1]} : vector<4x16xf32> to vector<1x8xf32>
    %19 = vector.broadcast %17 : vector<8x1xf32> to vector<8x8xf32>
    %20 = vector.broadcast %18 : vector<1x8xf32> to vector<8x8xf32>
    %21 = arith.addf %19, %20 : vector<8x8xf32>
    %cst_11 = arith.constant 0.000000e+00 : f32
    %22 = vector.broadcast %cst_11 : f32 to vector<8x8xf32>
    %23 = arith.cmpf ogt, %21, %22 : vector<8x8xf32>
    %cst_12 = arith.constant 2.000000e-01 : f32
    %24 = vector.broadcast %cst_12 : f32 to vector<8x8xf32>
    %25 = arith.mulf %24, %21 : vector<8x8xf32>
    %26 = arith.select %23, %21, %25 : vector<8x8xi1>, vector<8x8xf32>
    %27 = arith.addf %26, %16 : vector<8x8xf32>
    %cst_13 = arith.constant dense<0xFF800000> : vector<8xf32>
    %28 = vector.multi_reduction <maximumf>, %27, %cst_13 [1] : vector<8x8xf32> to vector<8xf32>
    %29 = vector.shape_cast %28 : vector<8xf32> to vector<8x1xf32>
    %30 = vector.broadcast %29 : vector<8x1xf32> to vector<8x8xf32>
    %31 = arith.subf %27, %30 : vector<8x8xf32>
    %32 = math.exp %31 : vector<8x8xf32>
    %33 = arith.truncf %32 : vector<8x8xf32> to vector<8x8xbf16>
    %34 = arith.extf %33 : vector<8x8xbf16> to vector<8x8xf32>
    %cst_14 = arith.constant dense<0.000000e+00> : vector<8xf32>
    %35 = vector.multi_reduction <add>, %34, %cst_14 [1] : vector<8x8xf32> to vector<8xf32>
    %36 = vector.shape_cast %35 : vector<8xf32> to vector<8x1xf32>
    %37 = vector.extract_strided_slice %3 {offsets = [0, 0], sizes = [8, 32], strides = [1, 1]} : vector<16x128xbf16> to vector<8x32xbf16>
    %cst_15 = arith.constant dense<0.000000e+00> : vector<8x32xf32>
    %38 = tpu.matmul %33, %37, %cst_15 {dimension_numbers = #tpu.dot_dimension_numbers<[1], [0], [0], [1], [0, 0, 1, 1], [], []>} : vector<8x8xbf16>, vector<8x32xbf16>, vector<8x32xf32> -> vector<8x32xf32>
    %39 = tpu.reciprocal %36 {approx = true} : vector<8x1xf32> -> vector<8x1xf32>
    %40 = vector.broadcast %39 : vector<8x1xf32> to vector<8x32xf32>
    %41 = arith.mulf %38, %40 : vector<8x32xf32>
    %cst_16 = arith.constant 0.000000e+00 : f32
    %42 = vector.broadcast %cst_16 : f32 to vector<8x32xf32>
    %43 = arith.minimumf %41, %42 : vector<8x32xf32>
    %44 = math.exp %43 : vector<8x32xf32>
    %cst_17 = arith.constant 1.000000e+00 : f32
    %45 = vector.broadcast %cst_17 : f32 to vector<8x32xf32>
    %46 = arith.subf %44, %45 : vector<8x32xf32>
    %cst_18 = arith.constant 0.000000e+00 : f32
    %47 = vector.broadcast %cst_18 : f32 to vector<8x32xf32>
    %48 = arith.cmpf ogt, %41, %47 : vector<8x32xf32>
    %49 = arith.select %48, %41, %46 : vector<8x32xi1>, vector<8x32xf32>
    %50 = vector.extract_strided_slice %6 {offsets = [0, 1], sizes = [8, 1], strides = [1, 1]} : vector<16x4xf32> to vector<8x1xf32>
    %51 = vector.extract_strided_slice %8 {offsets = [1, 0], sizes = [1, 8], strides = [1, 1]} : vector<4x16xf32> to vector<1x8xf32>
    %52 = vector.broadcast %50 : vector<8x1xf32> to vector<8x8xf32>
    %53 = vector.broadcast %51 : vector<1x8xf32> to vector<8x8xf32>
    %54 = arith.addf %52, %53 : vector<8x8xf32>
    %cst_19 = arith.constant 0.000000e+00 : f32
    %55 = vector.broadcast %cst_19 : f32 to vector<8x8xf32>
    %56 = arith.cmpf ogt, %54, %55 : vector<8x8xf32>
    %cst_20 = arith.constant 2.000000e-01 : f32
    %57 = vector.broadcast %cst_20 : f32 to vector<8x8xf32>
    %58 = arith.mulf %57, %54 : vector<8x8xf32>
    %59 = arith.select %56, %54, %58 : vector<8x8xi1>, vector<8x8xf32>
    %60 = arith.addf %59, %16 : vector<8x8xf32>
    %cst_21 = arith.constant dense<0xFF800000> : vector<8xf32>
    %61 = vector.multi_reduction <maximumf>, %60, %cst_21 [1] : vector<8x8xf32> to vector<8xf32>
    %62 = vector.shape_cast %61 : vector<8xf32> to vector<8x1xf32>
    %63 = vector.broadcast %62 : vector<8x1xf32> to vector<8x8xf32>
    %64 = arith.subf %60, %63 : vector<8x8xf32>
    %65 = math.exp %64 : vector<8x8xf32>
    %66 = arith.truncf %65 : vector<8x8xf32> to vector<8x8xbf16>
    %67 = arith.extf %66 : vector<8x8xbf16> to vector<8x8xf32>
    %cst_22 = arith.constant dense<0.000000e+00> : vector<8xf32>
    %68 = vector.multi_reduction <add>, %67, %cst_22 [1] : vector<8x8xf32> to vector<8xf32>
    %69 = vector.shape_cast %68 : vector<8xf32> to vector<8x1xf32>
    %70 = vector.extract_strided_slice %3 {offsets = [0, 32], sizes = [8, 32], strides = [1, 1]} : vector<16x128xbf16> to vector<8x32xbf16>
    %cst_23 = arith.constant dense<0.000000e+00> : vector<8x32xf32>
    %71 = tpu.matmul %66, %70, %cst_23 {dimension_numbers = #tpu.dot_dimension_numbers<[1], [0], [0], [1], [0, 0, 1, 1], [], []>} : vector<8x8xbf16>, vector<8x32xbf16>, vector<8x32xf32> -> vector<8x32xf32>
    %72 = tpu.reciprocal %69 {approx = true} : vector<8x1xf32> -> vector<8x1xf32>
    %73 = vector.broadcast %72 : vector<8x1xf32> to vector<8x32xf32>
    %74 = arith.mulf %71, %73 : vector<8x32xf32>
    %cst_24 = arith.constant 0.000000e+00 : f32
    %75 = vector.broadcast %cst_24 : f32 to vector<8x32xf32>
    %76 = arith.minimumf %74, %75 : vector<8x32xf32>
    %77 = math.exp %76 : vector<8x32xf32>
    %cst_25 = arith.constant 1.000000e+00 : f32
    %78 = vector.broadcast %cst_25 : f32 to vector<8x32xf32>
    %79 = arith.subf %77, %78 : vector<8x32xf32>
    %cst_26 = arith.constant 0.000000e+00 : f32
    %80 = vector.broadcast %cst_26 : f32 to vector<8x32xf32>
    %81 = arith.cmpf ogt, %74, %80 : vector<8x32xf32>
    %82 = arith.select %81, %74, %79 : vector<8x32xi1>, vector<8x32xf32>
    %83 = vector.extract_strided_slice %6 {offsets = [0, 2], sizes = [8, 1], strides = [1, 1]} : vector<16x4xf32> to vector<8x1xf32>
    %84 = vector.extract_strided_slice %8 {offsets = [2, 0], sizes = [1, 8], strides = [1, 1]} : vector<4x16xf32> to vector<1x8xf32>
    %85 = vector.broadcast %83 : vector<8x1xf32> to vector<8x8xf32>
    %86 = vector.broadcast %84 : vector<1x8xf32> to vector<8x8xf32>
    %87 = arith.addf %85, %86 : vector<8x8xf32>
    %cst_27 = arith.constant 0.000000e+00 : f32
    %88 = vector.broadcast %cst_27 : f32 to vector<8x8xf32>
    %89 = arith.cmpf ogt, %87, %88 : vector<8x8xf32>
    %cst_28 = arith.constant 2.000000e-01 : f32
    %90 = vector.broadcast %cst_28 : f32 to vector<8x8xf32>
    %91 = arith.mulf %90, %87 : vector<8x8xf32>
    %92 = arith.select %89, %87, %91 : vector<8x8xi1>, vector<8x8xf32>
    %93 = arith.addf %92, %16 : vector<8x8xf32>
    %cst_29 = arith.constant dense<0xFF800000> : vector<8xf32>
    %94 = vector.multi_reduction <maximumf>, %93, %cst_29 [1] : vector<8x8xf32> to vector<8xf32>
    %95 = vector.shape_cast %94 : vector<8xf32> to vector<8x1xf32>
    %96 = vector.broadcast %95 : vector<8x1xf32> to vector<8x8xf32>
    %97 = arith.subf %93, %96 : vector<8x8xf32>
    %98 = math.exp %97 : vector<8x8xf32>
    %99 = arith.truncf %98 : vector<8x8xf32> to vector<8x8xbf16>
    %100 = arith.extf %99 : vector<8x8xbf16> to vector<8x8xf32>
    %cst_30 = arith.constant dense<0.000000e+00> : vector<8xf32>
    %101 = vector.multi_reduction <add>, %100, %cst_30 [1] : vector<8x8xf32> to vector<8xf32>
    %102 = vector.shape_cast %101 : vector<8xf32> to vector<8x1xf32>
    %103 = vector.extract_strided_slice %3 {offsets = [0, 64], sizes = [8, 32], strides = [1, 1]} : vector<16x128xbf16> to vector<8x32xbf16>
    %cst_31 = arith.constant dense<0.000000e+00> : vector<8x32xf32>
    %104 = tpu.matmul %99, %103, %cst_31 {dimension_numbers = #tpu.dot_dimension_numbers<[1], [0], [0], [1], [0, 0, 1, 1], [], []>} : vector<8x8xbf16>, vector<8x32xbf16>, vector<8x32xf32> -> vector<8x32xf32>
    %105 = tpu.reciprocal %102 {approx = true} : vector<8x1xf32> -> vector<8x1xf32>
    %106 = vector.broadcast %105 : vector<8x1xf32> to vector<8x32xf32>
    %107 = arith.mulf %104, %106 : vector<8x32xf32>
    %cst_32 = arith.constant 0.000000e+00 : f32
    %108 = vector.broadcast %cst_32 : f32 to vector<8x32xf32>
    %109 = arith.minimumf %107, %108 : vector<8x32xf32>
    %110 = math.exp %109 : vector<8x32xf32>
    %cst_33 = arith.constant 1.000000e+00 : f32
    %111 = vector.broadcast %cst_33 : f32 to vector<8x32xf32>
    %112 = arith.subf %110, %111 : vector<8x32xf32>
    %cst_34 = arith.constant 0.000000e+00 : f32
    %113 = vector.broadcast %cst_34 : f32 to vector<8x32xf32>
    %114 = arith.cmpf ogt, %107, %113 : vector<8x32xf32>
    %115 = arith.select %114, %107, %112 : vector<8x32xi1>, vector<8x32xf32>
    %116 = vector.extract_strided_slice %6 {offsets = [0, 3], sizes = [8, 1], strides = [1, 1]} : vector<16x4xf32> to vector<8x1xf32>
    %117 = vector.extract_strided_slice %8 {offsets = [3, 0], sizes = [1, 8], strides = [1, 1]} : vector<4x16xf32> to vector<1x8xf32>
    %118 = vector.broadcast %116 : vector<8x1xf32> to vector<8x8xf32>
    %119 = vector.broadcast %117 : vector<1x8xf32> to vector<8x8xf32>
    %120 = arith.addf %118, %119 : vector<8x8xf32>
    %cst_35 = arith.constant 0.000000e+00 : f32
    %121 = vector.broadcast %cst_35 : f32 to vector<8x8xf32>
    %122 = arith.cmpf ogt, %120, %121 : vector<8x8xf32>
    %cst_36 = arith.constant 2.000000e-01 : f32
    %123 = vector.broadcast %cst_36 : f32 to vector<8x8xf32>
    %124 = arith.mulf %123, %120 : vector<8x8xf32>
    %125 = arith.select %122, %120, %124 : vector<8x8xi1>, vector<8x8xf32>
    %126 = arith.addf %125, %16 : vector<8x8xf32>
    %cst_37 = arith.constant dense<0xFF800000> : vector<8xf32>
    %127 = vector.multi_reduction <maximumf>, %126, %cst_37 [1] : vector<8x8xf32> to vector<8xf32>
    %128 = vector.shape_cast %127 : vector<8xf32> to vector<8x1xf32>
    %129 = vector.broadcast %128 : vector<8x1xf32> to vector<8x8xf32>
    %130 = arith.subf %126, %129 : vector<8x8xf32>
    %131 = math.exp %130 : vector<8x8xf32>
    %132 = arith.truncf %131 : vector<8x8xf32> to vector<8x8xbf16>
    %133 = arith.extf %132 : vector<8x8xbf16> to vector<8x8xf32>
    %cst_38 = arith.constant dense<0.000000e+00> : vector<8xf32>
    %134 = vector.multi_reduction <add>, %133, %cst_38 [1] : vector<8x8xf32> to vector<8xf32>
    %135 = vector.shape_cast %134 : vector<8xf32> to vector<8x1xf32>
    %136 = vector.extract_strided_slice %3 {offsets = [0, 96], sizes = [8, 32], strides = [1, 1]} : vector<16x128xbf16> to vector<8x32xbf16>
    %cst_39 = arith.constant dense<0.000000e+00> : vector<8x32xf32>
    %137 = tpu.matmul %132, %136, %cst_39 {dimension_numbers = #tpu.dot_dimension_numbers<[1], [0], [0], [1], [0, 0, 1, 1], [], []>} : vector<8x8xbf16>, vector<8x32xbf16>, vector<8x32xf32> -> vector<8x32xf32>
    %138 = tpu.reciprocal %135 {approx = true} : vector<8x1xf32> -> vector<8x1xf32>
    %139 = vector.broadcast %138 : vector<8x1xf32> to vector<8x32xf32>
    %140 = arith.mulf %137, %139 : vector<8x32xf32>
    %cst_40 = arith.constant 0.000000e+00 : f32
    %141 = vector.broadcast %cst_40 : f32 to vector<8x32xf32>
    %142 = arith.minimumf %140, %141 : vector<8x32xf32>
    %143 = math.exp %142 : vector<8x32xf32>
    %cst_41 = arith.constant 1.000000e+00 : f32
    %144 = vector.broadcast %cst_41 : f32 to vector<8x32xf32>
    %145 = arith.subf %143, %144 : vector<8x32xf32>
    %cst_42 = arith.constant 0.000000e+00 : f32
    %146 = vector.broadcast %cst_42 : f32 to vector<8x32xf32>
    %147 = arith.cmpf ogt, %140, %146 : vector<8x32xf32>
    %148 = arith.select %147, %140, %145 : vector<8x32xi1>, vector<8x32xf32>
    %149 = tpu.concatenate %49, %82, %115, %148 in 1 : vector<8x32xf32>, vector<8x32xf32>, vector<8x32xf32>, vector<8x32xf32> -> vector<8x128xf32>
    %c1 = arith.constant 1 : index
    %c0_43 = arith.constant 0 : index
    %c0_44 = arith.constant 0 : index
    %150 = vector.load %arg4[%c1, %c0_43, %c0_44] : memref<2x8x8xi8, #tpu.memory_space<vmem>>, vector<1x8x8xi8>
    %151 = vector.shape_cast %150 : vector<1x8x8xi8> to vector<8x8xi8>
    %152 = arith.extsi %151 : vector<8x8xi8> to vector<8x8xi32>
    %c0_i32_45 = arith.constant 0 : i32
    %153 = vector.broadcast %c0_i32_45 : i32 to vector<8x8xi32>
    %154 = arith.cmpi sgt, %152, %153 : vector<8x8xi32>
    %cst_46 = arith.constant 0.000000e+00 : f32
    %cst_47 = arith.constant -9.000000e+15 : f32
    %155 = vector.broadcast %cst_46 : f32 to vector<8x8xf32>
    %156 = vector.broadcast %cst_47 : f32 to vector<8x8xf32>
    %157 = arith.select %154, %155, %156 : vector<8x8xi1>, vector<8x8xf32>
    %158 = vector.extract_strided_slice %6 {offsets = [8, 0], sizes = [8, 1], strides = [1, 1]} : vector<16x4xf32> to vector<8x1xf32>
    %159 = vector.extract_strided_slice %8 {offsets = [0, 8], sizes = [1, 8], strides = [1, 1]} : vector<4x16xf32> to vector<1x8xf32>
    %160 = vector.broadcast %158 : vector<8x1xf32> to vector<8x8xf32>
    %161 = vector.broadcast %159 : vector<1x8xf32> to vector<8x8xf32>
    %162 = arith.addf %160, %161 : vector<8x8xf32>
    %cst_48 = arith.constant 0.000000e+00 : f32
    %163 = vector.broadcast %cst_48 : f32 to vector<8x8xf32>
    %164 = arith.cmpf ogt, %162, %163 : vector<8x8xf32>
    %cst_49 = arith.constant 2.000000e-01 : f32
    %165 = vector.broadcast %cst_49 : f32 to vector<8x8xf32>
    %166 = arith.mulf %165, %162 : vector<8x8xf32>
    %167 = arith.select %164, %162, %166 : vector<8x8xi1>, vector<8x8xf32>
    %168 = arith.addf %167, %157 : vector<8x8xf32>
    %cst_50 = arith.constant dense<0xFF800000> : vector<8xf32>
    %169 = vector.multi_reduction <maximumf>, %168, %cst_50 [1] : vector<8x8xf32> to vector<8xf32>
    %170 = vector.shape_cast %169 : vector<8xf32> to vector<8x1xf32>
    %171 = vector.broadcast %170 : vector<8x1xf32> to vector<8x8xf32>
    %172 = arith.subf %168, %171 : vector<8x8xf32>
    %173 = math.exp %172 : vector<8x8xf32>
    %174 = arith.truncf %173 : vector<8x8xf32> to vector<8x8xbf16>
    %175 = arith.extf %174 : vector<8x8xbf16> to vector<8x8xf32>
    %cst_51 = arith.constant dense<0.000000e+00> : vector<8xf32>
    %176 = vector.multi_reduction <add>, %175, %cst_51 [1] : vector<8x8xf32> to vector<8xf32>
    %177 = vector.shape_cast %176 : vector<8xf32> to vector<8x1xf32>
    %178 = vector.extract_strided_slice %3 {offsets = [8, 0], sizes = [8, 32], strides = [1, 1]} : vector<16x128xbf16> to vector<8x32xbf16>
    %cst_52 = arith.constant dense<0.000000e+00> : vector<8x32xf32>
    %179 = tpu.matmul %174, %178, %cst_52 {dimension_numbers = #tpu.dot_dimension_numbers<[1], [0], [0], [1], [0, 0, 1, 1], [], []>} : vector<8x8xbf16>, vector<8x32xbf16>, vector<8x32xf32> -> vector<8x32xf32>
    %180 = tpu.reciprocal %177 {approx = true} : vector<8x1xf32> -> vector<8x1xf32>
    %181 = vector.broadcast %180 : vector<8x1xf32> to vector<8x32xf32>
    %182 = arith.mulf %179, %181 : vector<8x32xf32>
    %cst_53 = arith.constant 0.000000e+00 : f32
    %183 = vector.broadcast %cst_53 : f32 to vector<8x32xf32>
    %184 = arith.minimumf %182, %183 : vector<8x32xf32>
    %185 = math.exp %184 : vector<8x32xf32>
    %cst_54 = arith.constant 1.000000e+00 : f32
    %186 = vector.broadcast %cst_54 : f32 to vector<8x32xf32>
    %187 = arith.subf %185, %186 : vector<8x32xf32>
    %cst_55 = arith.constant 0.000000e+00 : f32
    %188 = vector.broadcast %cst_55 : f32 to vector<8x32xf32>
    %189 = arith.cmpf ogt, %182, %188 : vector<8x32xf32>
    %190 = arith.select %189, %182, %187 : vector<8x32xi1>, vector<8x32xf32>
    %191 = vector.extract_strided_slice %6 {offsets = [8, 1], sizes = [8, 1], strides = [1, 1]} : vector<16x4xf32> to vector<8x1xf32>
    %192 = vector.extract_strided_slice %8 {offsets = [1, 8], sizes = [1, 8], strides = [1, 1]} : vector<4x16xf32> to vector<1x8xf32>
    %193 = vector.broadcast %191 : vector<8x1xf32> to vector<8x8xf32>
    %194 = vector.broadcast %192 : vector<1x8xf32> to vector<8x8xf32>
    %195 = arith.addf %193, %194 : vector<8x8xf32>
    %cst_56 = arith.constant 0.000000e+00 : f32
    %196 = vector.broadcast %cst_56 : f32 to vector<8x8xf32>
    %197 = arith.cmpf ogt, %195, %196 : vector<8x8xf32>
    %cst_57 = arith.constant 2.000000e-01 : f32
    %198 = vector.broadcast %cst_57 : f32 to vector<8x8xf32>
    %199 = arith.mulf %198, %195 : vector<8x8xf32>
    %200 = arith.select %197, %195, %199 : vector<8x8xi1>, vector<8x8xf32>
    %201 = arith.addf %200, %157 : vector<8x8xf32>
    %cst_58 = arith.constant dense<0xFF800000> : vector<8xf32>
    %202 = vector.multi_reduction <maximumf>, %201, %cst_58 [1] : vector<8x8xf32> to vector<8xf32>
    %203 = vector.shape_cast %202 : vector<8xf32> to vector<8x1xf32>
    %204 = vector.broadcast %203 : vector<8x1xf32> to vector<8x8xf32>
    %205 = arith.subf %201, %204 : vector<8x8xf32>
    %206 = math.exp %205 : vector<8x8xf32>
    %207 = arith.truncf %206 : vector<8x8xf32> to vector<8x8xbf16>
    %208 = arith.extf %207 : vector<8x8xbf16> to vector<8x8xf32>
    %cst_59 = arith.constant dense<0.000000e+00> : vector<8xf32>
    %209 = vector.multi_reduction <add>, %208, %cst_59 [1] : vector<8x8xf32> to vector<8xf32>
    %210 = vector.shape_cast %209 : vector<8xf32> to vector<8x1xf32>
    %211 = vector.extract_strided_slice %3 {offsets = [8, 32], sizes = [8, 32], strides = [1, 1]} : vector<16x128xbf16> to vector<8x32xbf16>
    %cst_60 = arith.constant dense<0.000000e+00> : vector<8x32xf32>
    %212 = tpu.matmul %207, %211, %cst_60 {dimension_numbers = #tpu.dot_dimension_numbers<[1], [0], [0], [1], [0, 0, 1, 1], [], []>} : vector<8x8xbf16>, vector<8x32xbf16>, vector<8x32xf32> -> vector<8x32xf32>
    %213 = tpu.reciprocal %210 {approx = true} : vector<8x1xf32> -> vector<8x1xf32>
    %214 = vector.broadcast %213 : vector<8x1xf32> to vector<8x32xf32>
    %215 = arith.mulf %212, %214 : vector<8x32xf32>
    %cst_61 = arith.constant 0.000000e+00 : f32
    %216 = vector.broadcast %cst_61 : f32 to vector<8x32xf32>
    %217 = arith.minimumf %215, %216 : vector<8x32xf32>
    %218 = math.exp %217 : vector<8x32xf32>
    %cst_62 = arith.constant 1.000000e+00 : f32
    %219 = vector.broadcast %cst_62 : f32 to vector<8x32xf32>
    %220 = arith.subf %218, %219 : vector<8x32xf32>
    %cst_63 = arith.constant 0.000000e+00 : f32
    %221 = vector.broadcast %cst_63 : f32 to vector<8x32xf32>
    %222 = arith.cmpf ogt, %215, %221 : vector<8x32xf32>
    %223 = arith.select %222, %215, %220 : vector<8x32xi1>, vector<8x32xf32>
    %224 = vector.extract_strided_slice %6 {offsets = [8, 2], sizes = [8, 1], strides = [1, 1]} : vector<16x4xf32> to vector<8x1xf32>
    %225 = vector.extract_strided_slice %8 {offsets = [2, 8], sizes = [1, 8], strides = [1, 1]} : vector<4x16xf32> to vector<1x8xf32>
    %226 = vector.broadcast %224 : vector<8x1xf32> to vector<8x8xf32>
    %227 = vector.broadcast %225 : vector<1x8xf32> to vector<8x8xf32>
    %228 = arith.addf %226, %227 : vector<8x8xf32>
    %cst_64 = arith.constant 0.000000e+00 : f32
    %229 = vector.broadcast %cst_64 : f32 to vector<8x8xf32>
    %230 = arith.cmpf ogt, %228, %229 : vector<8x8xf32>
    %cst_65 = arith.constant 2.000000e-01 : f32
    %231 = vector.broadcast %cst_65 : f32 to vector<8x8xf32>
    %232 = arith.mulf %231, %228 : vector<8x8xf32>
    %233 = arith.select %230, %228, %232 : vector<8x8xi1>, vector<8x8xf32>
    %234 = arith.addf %233, %157 : vector<8x8xf32>
    %cst_66 = arith.constant dense<0xFF800000> : vector<8xf32>
    %235 = vector.multi_reduction <maximumf>, %234, %cst_66 [1] : vector<8x8xf32> to vector<8xf32>
    %236 = vector.shape_cast %235 : vector<8xf32> to vector<8x1xf32>
    %237 = vector.broadcast %236 : vector<8x1xf32> to vector<8x8xf32>
    %238 = arith.subf %234, %237 : vector<8x8xf32>
    %239 = math.exp %238 : vector<8x8xf32>
    %240 = arith.truncf %239 : vector<8x8xf32> to vector<8x8xbf16>
    %241 = arith.extf %240 : vector<8x8xbf16> to vector<8x8xf32>
    %cst_67 = arith.constant dense<0.000000e+00> : vector<8xf32>
    %242 = vector.multi_reduction <add>, %241, %cst_67 [1] : vector<8x8xf32> to vector<8xf32>
    %243 = vector.shape_cast %242 : vector<8xf32> to vector<8x1xf32>
    %244 = vector.extract_strided_slice %3 {offsets = [8, 64], sizes = [8, 32], strides = [1, 1]} : vector<16x128xbf16> to vector<8x32xbf16>
    %cst_68 = arith.constant dense<0.000000e+00> : vector<8x32xf32>
    %245 = tpu.matmul %240, %244, %cst_68 {dimension_numbers = #tpu.dot_dimension_numbers<[1], [0], [0], [1], [0, 0, 1, 1], [], []>} : vector<8x8xbf16>, vector<8x32xbf16>, vector<8x32xf32> -> vector<8x32xf32>
    %246 = tpu.reciprocal %243 {approx = true} : vector<8x1xf32> -> vector<8x1xf32>
    %247 = vector.broadcast %246 : vector<8x1xf32> to vector<8x32xf32>
    %248 = arith.mulf %245, %247 : vector<8x32xf32>
    %cst_69 = arith.constant 0.000000e+00 : f32
    %249 = vector.broadcast %cst_69 : f32 to vector<8x32xf32>
    %250 = arith.minimumf %248, %249 : vector<8x32xf32>
    %251 = math.exp %250 : vector<8x32xf32>
    %cst_70 = arith.constant 1.000000e+00 : f32
    %252 = vector.broadcast %cst_70 : f32 to vector<8x32xf32>
    %253 = arith.subf %251, %252 : vector<8x32xf32>
    %cst_71 = arith.constant 0.000000e+00 : f32
    %254 = vector.broadcast %cst_71 : f32 to vector<8x32xf32>
    %255 = arith.cmpf ogt, %248, %254 : vector<8x32xf32>
    %256 = arith.select %255, %248, %253 : vector<8x32xi1>, vector<8x32xf32>
    %257 = vector.extract_strided_slice %6 {offsets = [8, 3], sizes = [8, 1], strides = [1, 1]} : vector<16x4xf32> to vector<8x1xf32>
    %258 = vector.extract_strided_slice %8 {offsets = [3, 8], sizes = [1, 8], strides = [1, 1]} : vector<4x16xf32> to vector<1x8xf32>
    %259 = vector.broadcast %257 : vector<8x1xf32> to vector<8x8xf32>
    %260 = vector.broadcast %258 : vector<1x8xf32> to vector<8x8xf32>
    %261 = arith.addf %259, %260 : vector<8x8xf32>
    %cst_72 = arith.constant 0.000000e+00 : f32
    %262 = vector.broadcast %cst_72 : f32 to vector<8x8xf32>
    %263 = arith.cmpf ogt, %261, %262 : vector<8x8xf32>
    %cst_73 = arith.constant 2.000000e-01 : f32
    %264 = vector.broadcast %cst_73 : f32 to vector<8x8xf32>
    %265 = arith.mulf %264, %261 : vector<8x8xf32>
    %266 = arith.select %263, %261, %265 : vector<8x8xi1>, vector<8x8xf32>
    %267 = arith.addf %266, %157 : vector<8x8xf32>
    %cst_74 = arith.constant dense<0xFF800000> : vector<8xf32>
    %268 = vector.multi_reduction <maximumf>, %267, %cst_74 [1] : vector<8x8xf32> to vector<8xf32>
    %269 = vector.shape_cast %268 : vector<8xf32> to vector<8x1xf32>
    %270 = vector.broadcast %269 : vector<8x1xf32> to vector<8x8xf32>
    %271 = arith.subf %267, %270 : vector<8x8xf32>
    %272 = math.exp %271 : vector<8x8xf32>
    %273 = arith.truncf %272 : vector<8x8xf32> to vector<8x8xbf16>
    %274 = arith.extf %273 : vector<8x8xbf16> to vector<8x8xf32>
    %cst_75 = arith.constant dense<0.000000e+00> : vector<8xf32>
    %275 = vector.multi_reduction <add>, %274, %cst_75 [1] : vector<8x8xf32> to vector<8xf32>
    %276 = vector.shape_cast %275 : vector<8xf32> to vector<8x1xf32>
    %277 = vector.extract_strided_slice %3 {offsets = [8, 96], sizes = [8, 32], strides = [1, 1]} : vector<16x128xbf16> to vector<8x32xbf16>
    %cst_76 = arith.constant dense<0.000000e+00> : vector<8x32xf32>
    %278 = tpu.matmul %273, %277, %cst_76 {dimension_numbers = #tpu.dot_dimension_numbers<[1], [0], [0], [1], [0, 0, 1, 1], [], []>} : vector<8x8xbf16>, vector<8x32xbf16>, vector<8x32xf32> -> vector<8x32xf32>
    %279 = tpu.reciprocal %276 {approx = true} : vector<8x1xf32> -> vector<8x1xf32>
    %280 = vector.broadcast %279 : vector<8x1xf32> to vector<8x32xf32>
    %281 = arith.mulf %278, %280 : vector<8x32xf32>
    %cst_77 = arith.constant 0.000000e+00 : f32
    %282 = vector.broadcast %cst_77 : f32 to vector<8x32xf32>
    %283 = arith.minimumf %281, %282 : vector<8x32xf32>
    %284 = math.exp %283 : vector<8x32xf32>
    %cst_78 = arith.constant 1.000000e+00 : f32
    %285 = vector.broadcast %cst_78 : f32 to vector<8x32xf32>
    %286 = arith.subf %284, %285 : vector<8x32xf32>
    %cst_79 = arith.constant 0.000000e+00 : f32
    %287 = vector.broadcast %cst_79 : f32 to vector<8x32xf32>
    %288 = arith.cmpf ogt, %281, %287 : vector<8x32xf32>
    %289 = arith.select %288, %281, %286 : vector<8x32xi1>, vector<8x32xf32>
    %290 = tpu.concatenate %190, %223, %256, %289 in 1 : vector<8x32xf32>, vector<8x32xf32>, vector<8x32xf32>, vector<8x32xf32> -> vector<8x128xf32>
    %291 = tpu.concatenate %149, %290 in 0 : vector<8x128xf32>, vector<8x128xf32> -> vector<16x128xf32>
    %c0_80 = arith.constant 0 : index
    %c0_81 = arith.constant 0 : index
    %292 = vector.load %arg5[%c0_80, %c0_81] : memref<16x128xf32, #tpu.memory_space<vmem>>, vector<16x128xf32>
    tpu.vector_store %arg5[%c0_80, %c0_81], %291 {strides = array<i32>} : memref<16x128xf32, #tpu.memory_space<vmem>>, vector<16x128xf32>,
    return
  }
  func.func @transform_0(%arg0: i32) -> (i32, i32) {
    %c0_i32 = arith.constant 0 : i32
    %c0_i32_0 = arith.constant 0 : i32
    return %arg0, %c0_i32 : i32, i32
  }
  func.func @transform_1(%arg0: i32) -> (i32, i32) {
    %c0_i32 = arith.constant 0 : i32
    %c0_i32_0 = arith.constant 0 : i32
    %c0_i32_1 = arith.constant 0 : i32
    return %c0_i32, %c0_i32_0 : i32, i32
  }
  func.func @transform_2(%arg0: i32) -> (i32, i32) {
    %c0_i32 = arith.constant 0 : i32
    %c0_i32_0 = arith.constant 0 : i32
    %c0_i32_1 = arith.constant 0 : i32
    return %c0_i32, %c0_i32_0 : i32, i32
  }
  func.func @transform_3(%arg0: i32) -> (i32, i32, i32) {
    %c0_i32 = arith.constant 0 : i32
    %c0_i32_0 = arith.constant 0 : i32
    %c0_i32_1 = arith.constant 0 : i32
    return %arg0, %c0_i32, %c0_i32_0 : i32, i32, i32
  }
  func.func @transform_4(%arg0: i32) -> (i32, i32) {
    %c0_i32 = arith.constant 0 : i32
    %c0_i32_0 = arith.constant 0 : i32
    return %arg0, %c0_i32 : i32, i32
  }
}

</mosaic_0001>

<llo_original>
// kernel: gat_forward.1
$region0: #{gat_forward.1}
  #allocation0 [shape = 'u32[]', space=smem, size = 0x4, offset = 0x4, fixed_abs, tag = 'smem constant byte address 0x4 - core index']
  #allocation1 [shape = 'u32[144,128]{1,0:T(1,128)}', space=vmem, size = 0x12000, scoped, tag = 'internal scratch']
  %s0 = inlined_call_operand.vmem [shape: bf16[32,32], index: 0, kind: input, shape index: {}]
  %s1 = inlined_call_operand.vmem [shape: bf16[32,128], index: 1, kind: input, shape index: {}]
  %s2 = inlined_call_operand.vmem [shape: bf16[128,8], index: 2, kind: input, shape index: {}]
  %s3 = inlined_call_operand.vmem [shape: s8[4,8,8], index: 3, kind: input, shape index: {}]
  %s4 = inlined_call_operand.hbm [shape: f32[32,128], index: 4, kind: output, shape index: {}]
  %s5 = sld [smem:[#allocation0]]
  $region49: #{gat_forward.1} parent=0
    _
  %s7 = ssub.s32 1, %s5
  %s8 = scalar_select 0, %s7, %s5
  $region1: #{gat_forward.1} parent=0
    #allocation2 [shape = 'u8[16384]{0}', space=vmem, size = 0x4000, scoped, tag = 'output window, operand 0']
    #allocation3 [shape = 's32[2]{0}', space=sflag, size = 0x8, scoped, tag = 'scoped memory for gat_forward.1']
    %9 = vsyncpa [#allocation3], 0
    %s10 = scalar_lea.sflag [#allocation3], 1
    %11 = vsyncpa %s10, 0
    loop: start=0, step=1, limit=4
    $region2: #{gat_forward.1} parent=1 // loop_pre_header
      _
    $region3: #{gat_forward.1} parent=1 // loop_header
      %s13 = sphi 0, %s17
      %p14 = scmp.ge.s32.totalorder %s13, 4
      %s23 = sphi 0, %s25
      %s26 = sphi 0, %s23
      %s27 = sphi 0, %s26
      %s43 = sphi 0, %s27
      %s47 = sphi 0, %s47
      %s49 = sphi 0, %s47
      %s50 = sphi 0, %s49
      %s64 = sphi 0, %s50
      %s68 = sphi 0, %s68
      %s70 = sphi 0, %s68
      %s71 = sphi 0, %s70
      %s85 = sphi 0, %s71
      %s91 = sphi 0, %s93
      %s94 = sphi 0, %s91
      %s95 = sphi 0, %s94
      %s111 = sphi 0, %s95
      %s117 = sphi 0, %s119
      %s120 = sphi 0, %s117
      %s121 = sphi 0, %s120
      %s137 = sphi 0, %s121
    $region4: #{gat_forward.1} parent=1 // loop_header_branch
      %16 = sbr.rel (%p14) target = $region8
    $region5: #{gat_forward.1} parent=1 // loop_body
      %s18 = ssub.s32 %s13, 1
      %s19 = ssub.s32 %s13, 2
      %s20 = sadd.s32 %s13, 1
      %s21 = ssub.s32 %s13, %s20
      %p22 = scmp.eq.s32.totalorder %s21, 0
      %s24 = sadd.s32 %s23, 1
      %s25 = scalar_select %p22, %s23, %s24
      %p28 = pneg %p22
      %p29 = scmp.eq.s32.totalorder %s13, 1
      %p30 = por %p28, %p29
      %p31 = scmp.ne.s32.totalorder %s23, %s26
      %p32 = scmp.eq.s32.totalorder %s13, 0
      %p33 = por %p31, %p32
      %p34 = scmp.ne.s32.totalorder %s23, %s26
      %p35 = scmp.eq.s32.totalorder %s18, 1
      %p36 = por %p34, %p35
      %p37 = scmp.ne.s32.totalorder %s26, %s27
      %p38 = scmp.eq.s32.totalorder %s18, 0
      %p39 = por %p37, %p38
      %p40 = scmp.ne.s32.totalorder %s26, %s27
      %p41 = scmp.eq.s32.totalorder %s19, 1
      %p42 = por %p40, %p41
      %p44 = scmp.ne.s32.totalorder %s27, %s43
      %p45 = scmp.eq.s32.totalorder %s19, 0
      %p46 = por %p44, %p45
      %s48 = sadd.s32 %s47, 1
      %p51 = scmp.eq.s32.totalorder %s13, 1
      %p52 = scmp.ne.s32.totalorder %s47, %s49
      %p53 = scmp.eq.s32.totalorder %s13, 0
      %p54 = por %p52, %p53
      %p55 = scmp.ne.s32.totalorder %s47, %s49
      %p56 = scmp.eq.s32.totalorder %s18, 1
      %p57 = por %p55, %p56
      %p58 = scmp.ne.s32.totalorder %s49, %s50
      %p59 = scmp.eq.s32.totalorder %s18, 0
      %p60 = por %p58, %p59
      %p61 = scmp.ne.s32.totalorder %s49, %s50
      %p62 = scmp.eq.s32.totalorder %s19, 1
      %p63 = por %p61, %p62
      %p65 = scmp.ne.s32.totalorder %s50, %s64
      %p66 = scmp.eq.s32.totalorder %s19, 0
      %p67 = por %p65, %p66
      %s69 = sadd.s32 %s68, 1
      %p72 = scmp.eq.s32.totalorder %s13, 1
      %p73 = scmp.ne.s32.totalorder %s68, %s70
      %p74 = scmp.eq.s32.totalorder %s13, 0
      %p75 = por %p73, %p74
      %p76 = scmp.ne.s32.totalorder %s68, %s70
      %p77 = scmp.eq.s32.totalorder %s18, 1
      %p78 = por %p76, %p77
      %p79 = scmp.ne.s32.totalorder %s70, %s71
      %p80 = scmp.eq.s32.totalorder %s18, 0
      %p81 = por %p79, %p80
      %p82 = scmp.ne.s32.totalorder %s70, %s71
      %p83 = scmp.eq.s32.totalorder %s19, 1
      %p84 = por %p82, %p83
      %p86 = scmp.ne.s32.totalorder %s71, %s85
      %p87 = scmp.eq.s32.totalorder %s19, 0
      %p88 = por %p86, %p87
      %s89 = ssub.s32 %s13, %s20
      %p90 = scmp.eq.s32.totalorder %s89, 0
      %s92 = sadd.s32 %s91, 1
      %s93 = scalar_select %p90, %s91, %s92
      %p96 = pneg %p90
      %p97 = scmp.eq.s32.totalorder %s13, 1
      %p98 = por %p96, %p97
      %p99 = scmp.ne.s32.totalorder %s91, %s94
      %p100 = scmp.eq.s32.totalorder %s13, 0
      %p101 = por %p99, %p100
      %p102 = scmp.ne.s32.totalorder %s91, %s94
      %p103 = scmp.eq.s32.totalorder %s18, 1
      %p104 = por %p102, %p103
      %p105 = scmp.ne.s32.totalorder %s94, %s95
      %p106 = scmp.eq.s32.totalorder %s18, 0
      %p107 = por %p105, %p106
      %p108 = scmp.ne.s32.totalorder %s94, %s95
      %p109 = scmp.eq.s32.totalorder %s19, 1
      %p110 = por %p108, %p109
      %p112 = scmp.ne.s32.totalorder %s95, %s111
      %p113 = scmp.eq.s32.totalorder %s19, 0
      %p114 = por %p112, %p113
      %s115 = ssub.s32 %s13, %s20
      %p116 = scmp.eq.s32.totalorder %s115, 0
      %s118 = sadd.s32 %s117, 1
      %s119 = scalar_select %p116, %s117, %s118
      %p122 = pneg %p116
      %p123 = scmp.eq.s32.totalorder %s13, 1
      %p124 = por %p122, %p123
      %p125 = scmp.ne.s32.totalorder %s117, %s120
      %p126 = scmp.eq.s32.totalorder %s13, 0
      %p127 = por %p125, %p126
      %p128 = scmp.ne.s32.totalorder %s117, %s120
      %p129 = scmp.eq.s32.totalorder %s18, 1
      %p130 = por %p128, %p129
      %p131 = scmp.ne.s32.totalorder %s120, %s121
      %p132 = scmp.eq.s32.totalorder %s18, 0
      %p133 = por %p131, %p132
      %p134 = scmp.ne.s32.totalorder %s120, %s121
      %p135 = scmp.eq.s32.totalorder %s19, 1
      %p136 = por %p134, %p135
      %p138 = scmp.ne.s32.totalorder %s121, %s137
      %p139 = scmp.eq.s32.totalorder %s19, 0
      %p140 = por %p138, %p139
      %p141 = scmp.le.s32.totalorder 1, %s13
      %p142 = scmp.lt.s32.totalorder %s13, 3
      %p143 = pnand %p141, %p142
      %p144 = pneg %p143
      // Predicated region
      $region9: #{gat_forward.1} parent=5 // pred_check
        _
      $region10: #{gat_forward.1} parent=5 // pred_check_branch
        %146 = sbr.rel (%p143) target = $region12
      $region11: #{gat_forward.1} parent=5 // pred_region
        %s147 = ssub.s32 %s13, 1
        // Predicated region
        $region13: #{gat_forward.1} parent=11 // pred_check
          %p148 = pneg %p60
        $region14: #{gat_forward.1} parent=11 // pred_check_branch
          %150 = sbr.rel (%p148) target = $region16
        $region15: #{gat_forward.1} parent=11 // pred_region
          _
        $region16: #{gat_forward.1} parent=11 // pred_fallthru
          _
        // Predicated region
        $region17: #{gat_forward.1} parent=11 // pred_check
          %p151 = pneg %p81
        $region18: #{gat_forward.1} parent=11 // pred_check_branch
          %153 = sbr.rel (%p151) target = $region20
        $region19: #{gat_forward.1} parent=11 // pred_region
          _
        $region20: #{gat_forward.1} parent=11 // pred_fallthru
          _
      $region12: #{gat_forward.1} parent=5 // pred_fallthru
        _
      %p154 = scmp.lt.s32.totalorder %s13, 2
      // Predicated region
      $region21: #{gat_forward.1} parent=5 // pred_check
        %p155 = pneg %p154
      $region22: #{gat_forward.1} parent=5 // pred_check_branch
        %157 = sbr.rel (%p155) target = $region24
      $region23: #{gat_forward.1} parent=5 // pred_region
        // Predicated region
        $region25: #{gat_forward.1} parent=23 // pred_check
          %p158 = pneg %p33
        $region26: #{gat_forward.1} parent=23 // pred_check_branch
          %160 = sbr.rel (%p158) target = $region28
        $region27: #{gat_forward.1} parent=23 // pred_region
          %s161 = smul.u32 2, %s13
          %p162 = scmp.lt.s32.totalorder %s161, 3
          %s163 = scalar_select %p162, %s161, 3
          %s164 = smul.addr %s163, 4
          %s165 = scalar_lea.vmem %s0, %s164
          %s166 = smul.u32 2, %s13
        $region28: #{gat_forward.1} parent=23 // pred_fallthru
          _
        // Predicated region
        $region29: #{gat_forward.1} parent=23 // pred_check
          %p167 = pneg %p101
        $region30: #{gat_forward.1} parent=23 // pred_check_branch
          %169 = sbr.rel (%p167) target = $region32
        $region31: #{gat_forward.1} parent=23 // pred_region
          %s170 = smul.u32 2, %s13
          %p171 = scmp.lt.s32.totalorder %s170, 3
          %s172 = scalar_select %p171, %s170, 3
          %s173 = smul.addr %s172, 2
          %s174 = scalar_lea.vmem %s3, %s173
          %s175 = smul.u32 2, %s13
        $region32: #{gat_forward.1} parent=23 // pred_fallthru
          _
      $region24: #{gat_forward.1} parent=5 // pred_fallthru
        _
      %p176 = scmp.le.s32.totalorder 1, %s13
      %p177 = scmp.lt.s32.totalorder %s13, 3
      %p178 = pnand %p176, %p177
      %p179 = pneg %p178
      // Predicated region
      $region33: #{gat_forward.1} parent=5 // pred_check
        _
      $region34: #{gat_forward.1} parent=5 // pred_check_branch
        %181 = sbr.rel (%p178) target = $region36
      $region35: #{gat_forward.1} parent=5 // pred_region
        %s182 = ssub.s32 %s13, 1
        %s183 = smul.u32 2, %s18
        %p184 = scmp.lt.s32.totalorder %s183, 3
        %s185 = scalar_select %p184, %s183, 3
        %s186 = smul.addr %s185, 4
        %s187 = scalar_lea.vmem %s0, %s186
        %p188 = pneg %p39
        %p189 = pneg %p36
        %p190 = pneg %p60
        %p191 = pneg %p57
        %p192 = pneg %p81
        %p193 = pneg %p78
        %s194 = smul.u32 2, %s18
        %p195 = scmp.lt.s32.totalorder %s194, 3
        %s196 = scalar_select %p195, %s194, 3
        %s197 = smul.addr %s196, 2
        %s198 = scalar_lea.vmem %s3, %s197
        %p199 = pneg %p107
        %p200 = pneg %p104
        %p201 = pneg %p133
        %p202 = pneg %p130
        %s203 = sand.u32 %s120, 1
        %s204 = scalar_lea.sflag [#allocation3], %s203
        %s205 = sand.u32 %s120, 1
        %s206 = smul.addr %s205, 16
        %s207 = scalar_lea.vmem [#allocation2], %s206
        %s208 = smul.u32 2, %s18
        %p209 = scmp.lt.s32.totalorder %s208, 3
        %s210 = scalar_select %p209, %s208, 3
        %s211 = smul.addr %s210, 4
        %s212 = scalar_lea.vmem %s0, %s211
        %s213 = smul.u32 2, %s18
        %s214 = smul.u32 2, %s18
        %p215 = scmp.lt.s32.totalorder %s214, 3
        %s216 = scalar_select %p215, %s214, 3
        %s217 = smul.addr %s216, 2
        %s218 = scalar_lea.vmem %s3, %s217
        %s219 = smul.u32 2, %s18
        %s220 = smul.u32 2, %s18
        %v222 = vld [vmem:[%s212] sm:$0xf]
        %v223 = vld [vmem:[%s212 + $0x4] sm:$0xf]
        %v224 = vld [vmem:[%s1] sm:$0xf]
        %v225 = vld [vmem:[%s1 + $0x4] sm:$0xf]
        %v226 = vld [vmem:[%s1 + $0x8] sm:$0xf]
        %v227 = vld [vmem:[%s1 + $0xc] sm:$0xf]
        %v230 = vunpack.c.l.b16 %v222
        %v231 = vunpack.c.l.b16 %v223
        %v232 = vpack.c.b16 %v231, %v230
        %v237 = vunpack.c.l.b16 %v224
        %v238 = vunpack.c.l.b16 %v225
        %v239 = vunpack.c.l.b16 %v226
        %v240 = vunpack.c.l.b16 %v227
        %v241 = vpack.c.b16 %v238, %v237
        %v242 = vpack.c.b16 %v240, %v239
        %vm245 = vcmask 261120
        %v247 = vsel %vm245, %v232, 0
        %249 = vmatprep.subr.bf16.mxu0 0
        %250 = vmatpush1.bf16.msra.mxu0 0
        %251 = vmatprep.subr.bf16.mxu0 0
        %252 = vmatpush1.bf16.msra.mxu0 0
        %253 = vmatprep.subr.bf16.mxu0 0
        %254 = vmatpush1.bf16.msra.mxu0 0
        %255 = vmatprep.subr.bf16.mxu0 0
        %256 = vmatpush1.bf16.msra.mxu0 0
        %257 = vmatprep.subr.bf16.mxu0 0
        %258 = vmatpush1.bf16.msra.mxu0 0
        %259 = vmatprep.subr.bf16.mxu0 0
        %260 = vmatpush1.bf16.msra.mxu0 0
        %261 = vmatprep.subr.bf16.mxu0 0
        %262 = vmatpush1.bf16.msra.mxu0 %v242
        %263 = vmatprep.subr.bf16.mxu0 0
        %264 = vmatpush1.bf16.msra.mxu0 %v241
        %265 = vmatprep.subr.bf16.mxu0 0
        %266 = vmatpush2.bf16.msra.mxu0 0
        %267 = vmatprep.subr.bf16.mxu0 0
        %268 = vmatpush2.bf16.msra.mxu0 0
        %269 = vmatprep.subr.bf16.mxu0 0
        %270 = vmatpush2.bf16.msra.mxu0 0
        %271 = vmatprep.subr.bf16.mxu0 0
        %272 = vmatpush2.bf16.msra.mxu0 0
        %273 = vmatprep.subr.bf16.mxu0 0
        %274 = vmatpush2.bf16.msra.mxu0 0
        %275 = vmatprep.subr.bf16.mxu0 0
        %276 = vmatpush2.bf16.msra.mxu0 0
        %277 = vmatprep.subr.bf16.mxu0 0
        %278 = vmatpush2.bf16.msra.mxu0 0
        %279 = vmatprep.subr.bf16.mxu0 0
        %280 = vmatpush2.bf16.msra.mxu0 0
        %281 = vmatprep.mubr.bf16.mxu0 0
        %282 = vmatmul.mubr.bf16.gmra.mxu0 %v247
        %v283 = vpop.f32.mrf.mxu0
        %v284 = vadd.f32 0.0, %v283
        %v285 = vpop.f32.mrf.mxu0
        %v286 = vpop.f32.mrf.mxu0
        %v287 = vadd.f32 0.0, %v286
        %v288 = vpop.f32.mrf.mxu0
        %289 = vdwg.mxu0
        %v290 = vpack.c.bf16 %v287, %v284
        %v291 = vld [vmem:[%s2] sm:$0xf]
        %v292 = vld [vmem:[%s2 + $0x4] sm:$0xf]
        %v293 = vld [vmem:[%s2 + $0x8] sm:$0xf]
        %v294 = vld [vmem:[%s2 + $0xc] sm:$0xf]
        %v295 = vld [vmem:[%s2 + $0x10] sm:$0xf]
        %v296 = vld [vmem:[%s2 + $0x14] sm:$0xf]
        %v297 = vld [vmem:[%s2 + $0x18] sm:$0xf]
        %v298 = vld [vmem:[%s2 + $0x1c] sm:$0xf]
        %v299 = vld [vmem:[%s2 + $0x20] sm:$0xf]
        %v300 = vld [vmem:[%s2 + $0x24] sm:$0xf]
        %v301 = vld [vmem:[%s2 + $0x28] sm:$0xf]
        %v302 = vld [vmem:[%s2 + $0x2c] sm:$0xf]
        %v303 = vld [vmem:[%s2 + $0x30] sm:$0xf]
        %v304 = vld [vmem:[%s2 + $0x34] sm:$0xf]
        %v305 = vld [vmem:[%s2 + $0x38] sm:$0xf]
        %v306 = vld [vmem:[%s2 + $0x3c] sm:$0xf]
        %v323 = vunpack.c.l.b16 %v291
        %v324 = vunpack.c.l.b16 %v292
        %v325 = vunpack.c.l.b16 %v293
        %v326 = vunpack.c.l.b16 %v294
        %v327 = vunpack.c.l.b16 %v295
        %v328 = vunpack.c.l.b16 %v296
        %v329 = vunpack.c.l.b16 %v297
        %v330 = vunpack.c.l.b16 %v298
        %v331 = vunpack.c.l.b16 %v299
        %v332 = vunpack.c.l.b16 %v300
        %v333 = vunpack.c.l.b16 %v301
        %v334 = vunpack.c.l.b16 %v302
        %v335 = vunpack.c.l.b16 %v303
        %v336 = vunpack.c.l.b16 %v304
        %v337 = vunpack.c.l.b16 %v305
        %v338 = vunpack.c.l.b16 %v306
        %v339 = vpack.c.b16 %v324, %v323
        %v340 = vpack.c.b16 %v326, %v325
        %v341 = vpack.c.b16 %v328, %v327
        %v342 = vpack.c.b16 %v330, %v329
        %v343 = vpack.c.b16 %v332, %v331
        %v344 = vpack.c.b16 %v334, %v333
        %v345 = vpack.c.b16 %v336, %v335
        %v346 = vpack.c.b16 %v338, %v337
        %355 = vmatprep.subr.bf16.mxu0 0
        %356 = vmatpush1.bf16.msra.mxu0 %v346
        %357 = vmatprep.subr.bf16.mxu0 0
        %358 = vmatpush1.bf16.msra.mxu0 %v345
        %359 = vmatprep.subr.bf16.mxu0 0
        %360 = vmatpush1.bf16.msra.mxu0 %v344
        %361 = vmatprep.subr.bf16.mxu0 0
        %362 = vmatpush1.bf16.msra.mxu0 %v343
        %363 = vmatprep.subr.bf16.mxu0 0
        %364 = vmatpush1.bf16.msra.mxu0 %v342
        %365 = vmatprep.subr.bf16.mxu0 0
        %366 = vmatpush1.bf16.msra.mxu0 %v341
        %367 = vmatprep.subr.bf16.mxu0 0
        %368 = vmatpush1.bf16.msra.mxu0 %v340
        %369 = vmatprep.subr.bf16.mxu0 0
        %370 = vmatpush1.bf16.msra.mxu0 %v339
        %371 = vmatprep.subr.bf16.mxu0 0
        %372 = vmatpush2.bf16.msra.mxu0 0
        %373 = vmatprep.subr.bf16.mxu0 0
        %374 = vmatpush2.bf16.msra.mxu0 0
        %375 = vmatprep.subr.bf16.mxu0 0
        %376 = vmatpush2.bf16.msra.mxu0 0
        %377 = vmatprep.subr.bf16.mxu0 0
        %378 = vmatpush2.bf16.msra.mxu0 0
        %379 = vmatprep.subr.bf16.mxu0 0
        %380 = vmatpush2.bf16.msra.mxu0 0
        %381 = vmatprep.subr.bf16.mxu0 0
        %382 = vmatpush2.bf16.msra.mxu0 0
        %383 = vmatprep.subr.bf16.mxu0 0
        %384 = vmatpush2.bf16.msra.mxu0 0
        %385 = vmatprep.subr.bf16.mxu0 0
        %386 = vmatpush2.bf16.msra.mxu0 0
        %387 = vmatprep.mubr.bf16.mxu0 0
        %388 = vmatmul.mubr.bf16.gmra.mxu0 %v290
        %v389 = vpop.f32.mrf.mxu0
        %v390 = vadd.f32 0.0, %v389
        %v391 = vpop.f32.mrf.mxu0
        %v392 = vpop.f32.mrf.mxu0
        %v393 = vadd.f32 0.0, %v392
        %v394 = vpop.f32.mrf.mxu0
        %395 = vdwg.mxu0
        %398 = vrot.lane.b32.xlu0 %v390, 124
        %v399 = vpop.permute.xlu0 %398
        %400 = vrot.lane.b32.xlu0 %v393, 124
        %v401 = vpop.permute.xlu0 %400
        %404 = vxpose.xlu0.b32.start [1/16] %v399, 128
        %405 = vxpose.xlu0.b32.cont [2/16] %v401, 128
        %406 = vxpose.xlu0.b32.cont [3/16] 0.0, 128
        %407 = vxpose.xlu0.b32.cont [4/16] 0.0, 128
        %408 = vxpose.xlu0.b32.cont [5/16] 0.0, 128
        %409 = vxpose.xlu0.b32.cont [6/16] 0.0, 128
        %410 = vxpose.xlu0.b32.cont [7/16] 0.0, 128
        %411 = vxpose.xlu0.b32.cont [8/16] 0.0, 128
        %412 = vxpose.xlu0.b32.cont [9/16] 0.0, 128
        %413 = vxpose.xlu0.b32.cont [10/16] 0.0, 128
        %414 = vxpose.xlu0.b32.cont [11/16] 0.0, 128
        %415 = vxpose.xlu0.b32.cont [12/16] 0.0, 128
        %416 = vxpose.xlu0.b32.cont [13/16] 0.0, 128
        %417 = vxpose.xlu0.b32.cont [14/16] 0.0, 128
        %418 = vxpose.xlu0.b32.cont [15/16] 0.0, 128
        %419 = vxpose.xlu0.b32.end [16/16] 0.0, 128
        %v420 = vpop.trf.xlu0
        %v421 = vpop.trf.xlu0
        %v422 = vpop.trf.xlu0
        %v423 = vpop.trf.xlu0
        %v424 = vpop.trf.xlu0
        %v425 = vpop.trf.xlu0
        %v426 = vpop.trf.xlu0
        %v427 = vpop.trf.xlu0
        %v428 = vpop.trf.xlu0
        %v429 = vpop.trf.xlu0
        %v430 = vpop.trf.xlu0
        %v431 = vpop.trf.xlu0
        %v432 = vpop.trf.xlu0
        %v433 = vpop.trf.xlu0
        %v434 = vpop.trf.xlu0
        %v435 = vpop.trf.xlu0
        %v436 = vld [vmem:[%s218] sm:$0x3]
        %v437 = vunpack.c.0.s8 %v436
        %vm438 = vcmp.gt.s32.totalorder %v437, 0
        %v439 = vsel %vm438, 0.0, -9e+15
        %440 = vset.pattern.permute.xlu0 0
        %441 = vperm.xlu0 %440, %v390
        %v442 = vpop.permute.xlu0 %441
        %v444 = vlaneseq
        %v445 = vshrl.u32 %v444, 7
        %v446 = vsub.s32 0, %v445
        %v447 = vrot.slane %v420, %v446
        %v448 = vadd.f32 %v442, %v447
        %vm449 = vcmp.gt.f32.partialorder %v448, 0.0
        %v450 = vmul.f32 %v448, 0.2
        %v451 = vsel %vm449, %v448, %v450
        %v452 = vadd.f32 %v451, %v439
        %vm453 = vcmask 64512
        %v454 = vsel %vm453, %v452, -inf
        %455 = vmax.xlane.f32.xlu0 %v454
        %v456 = vpop.xlane.xlu0 %455
        %v457 = vsub.f32 %v452, %v456
        %v458 = vmul.f32 %v457, 1.442695
        %v459 = vpow.pop %v458
        %v460 = vpack.c.bf16 %v459, %v459
        %v461 = vunpack.c.l.bf16 %v460
        %v462 = vsel %vm453, %v461, 0.0
        %463 = vadd.xlane.f32.xlu0 %v462
        %v464 = vpop.xlane.xlu0 %463
        %v466 = vsel %vm453, %v460, 0
        %vm468 = vcmask 1043456
        %v470 = vsel %vm468, %v290, 0
        %472 = vmatprep.subr.bf16.mxu0 0
        %473 = vmatpush1.bf16.msra.mxu0 0
        %474 = vmatprep.subr.bf16.mxu0 0
        %475 = vmatpush1.bf16.msra.mxu0 0
        %476 = vmatprep.subr.bf16.mxu0 0
        %477 = vmatpush1.bf16.msra.mxu0 0
        %478 = vmatprep.subr.bf16.mxu0 0
        %479 = vmatpush1.bf16.msra.mxu0 0
        %480 = vmatprep.subr.bf16.mxu0 0
        %481 = vmatpush1.bf16.msra.mxu0 0
        %482 = vmatprep.subr.bf16.mxu0 0
        %483 = vmatpush1.bf16.msra.mxu0 0
        %484 = vmatprep.subr.bf16.mxu0 0
        %485 = vmatpush1.bf16.msra.mxu0 0
        %486 = vmatprep.subr.bf16.mxu0 0
        %487 = vmatpush1.bf16.msra.mxu0 %v470
        %488 = vmatprep.subr.bf16.mxu0 0
        %489 = vmatpush2.bf16.msra.mxu0 0
        %490 = vmatprep.subr.bf16.mxu0 0
        %491 = vmatpush2.bf16.msra.mxu0 0
        %492 = vmatprep.subr.bf16.mxu0 0
        %493 = vmatpush2.bf16.msra.mxu0 0
        %494 = vmatprep.subr.bf16.mxu0 0
        %495 = vmatpush2.bf16.msra.mxu0 0
        %496 = vmatprep.subr.bf16.mxu0 0
        %497 = vmatpush2.bf16.msra.mxu0 0
        %498 = vmatprep.subr.bf16.mxu0 0
        %499 = vmatpush2.bf16.msra.mxu0 0
        %500 = vmatprep.subr.bf16.mxu0 0
        %501 = vmatpush2.bf16.msra.mxu0 0
        %502 = vmatprep.subr.bf16.mxu0 0
        %503 = vmatpush2.bf16.msra.mxu0 0
        %504 = vmatprep.mubr.bf16.mxu0 0
        %505 = vmatmul.mubr.bf16.gmra.mxu0 %v466
        %v506 = vpop.f32.mrf.mxu0
        %v507 = vadd.f32 0.0, %v506
        %v508 = vpop.f32.mrf.mxu0
        %v509 = vpop.f32.mrf.mxu0
        %v510 = vpop.f32.mrf.mxu0
        %511 = vdwg.mxu0
        %v512 = vrcp.pop %v464
        %v513 = vmul.f32 %v507, %v512
        %v514 = vmin.f32 %v513, 0.0
        %v515 = vmul.f32 %v514, 1.442695
        %v516 = vpow.pop %v515
        %v517 = vsub.f32 %v516, 1.0
        %vm518 = vcmp.gt.f32.partialorder %v513, 0.0
        %v519 = vsel %vm518, %v513, %v517
        %520 = vset.pattern.permute.xlu0 1
        %521 = vperm.xlu0 %520, %v390
        %v522 = vpop.permute.xlu0 %521
        %v524 = vlaneseq
        %v525 = vshrl.u32 %v524, 7
        %v526 = vsub.s32 1, %v525
        %v527 = vrot.slane %v420, %v526
        %v528 = vadd.f32 %v522, %v527
        %vm529 = vcmp.gt.f32.partialorder %v528, 0.0
        %v530 = vmul.f32 %v528, 0.2
        %v531 = vsel %vm529, %v528, %v530
        %v532 = vadd.f32 %v531, %v439
        %v533 = vsel %vm453, %v532, -inf
        %534 = vmax.xlane.f32.xlu0 %v533
        %v535 = vpop.xlane.xlu0 %534
        %v536 = vsub.f32 %v532, %v535
        %v537 = vmul.f32 %v536, 1.442695
        %v538 = vpow.pop %v537
        %v539 = vpack.c.bf16 %v538, %v538
        %v540 = vunpack.c.l.bf16 %v539
        %v541 = vsel %vm453, %v540, 0.0
        %542 = vadd.xlane.f32.xlu0 %v541
        %v543 = vpop.xlane.xlu0 %542
        %545 = vrot.lane.b32.xlu0 %v290, 96
        %v546 = vpop.permute.xlu0 %545
        %v548 = vsel %vm453, %v539, 0
        %v551 = vsel %vm468, %v546, 0
        %553 = vmatprep.subr.bf16.mxu0 0
        %554 = vmatpush1.bf16.msra.mxu0 0
        %555 = vmatprep.subr.bf16.mxu0 0
        %556 = vmatpush1.bf16.msra.mxu0 0
        %557 = vmatprep.subr.bf16.mxu0 0
        %558 = vmatpush1.bf16.msra.mxu0 0
        %559 = vmatprep.subr.bf16.mxu0 0
        %560 = vmatpush1.bf16.msra.mxu0 0
        %561 = vmatprep.subr.bf16.mxu0 0
        %562 = vmatpush1.bf16.msra.mxu0 0
        %563 = vmatprep.subr.bf16.mxu0 0
        %564 = vmatpush1.bf16.msra.mxu0 0
        %565 = vmatprep.subr.bf16.mxu0 0
        %566 = vmatpush1.bf16.msra.mxu0 0
        %567 = vmatprep.subr.bf16.mxu0 0
        %568 = vmatpush1.bf16.msra.mxu0 %v551
        %569 = vmatprep.subr.bf16.mxu0 0
        %570 = vmatpush2.bf16.msra.mxu0 0
        %571 = vmatprep.subr.bf16.mxu0 0
        %572 = vmatpush2.bf16.msra.mxu0 0
        %573 = vmatprep.subr.bf16.mxu0 0
        %574 = vmatpush2.bf16.msra.mxu0 0
        %575 = vmatprep.subr.bf16.mxu0 0
        %576 = vmatpush2.bf16.msra.mxu0 0
        %577 = vmatprep.subr.bf16.mxu0 0
        %578 = vmatpush2.bf16.msra.mxu0 0
        %579 = vmatprep.subr.bf16.mxu0 0
        %580 = vmatpush2.bf16.msra.mxu0 0
        %581 = vmatprep.subr.bf16.mxu0 0
        %582 = vmatpush2.bf16.msra.mxu0 0
        %583 = vmatprep.subr.bf16.mxu0 0
        %584 = vmatpush2.bf16.msra.mxu0 0
        %585 = vmatprep.mubr.bf16.mxu0 0
        %586 = vmatmul.mubr.bf16.gmra.mxu0 %v548
        %v587 = vpop.f32.mrf.mxu0
        %v588 = vadd.f32 0.0, %v587
        %v589 = vpop.f32.mrf.mxu0
        %v590 = vpop.f32.mrf.mxu0
        %v591 = vpop.f32.mrf.mxu0
        %592 = vdwg.mxu0
        %v593 = vrcp.pop %v543
        %v594 = vmul.f32 %v588, %v593
        %v595 = vmin.f32 %v594, 0.0
        %v596 = vmul.f32 %v595, 1.442695
        %v597 = vpow.pop %v596
        %v598 = vsub.f32 %v597, 1.0
        %vm599 = vcmp.gt.f32.partialorder %v594, 0.0
        %v600 = vsel %vm599, %v594, %v598
        %601 = vset.pattern.permute.xlu0 2
        %602 = vperm.xlu0 %601, %v390
        %v603 = vpop.permute.xlu0 %602
        %v605 = vlaneseq
        %v606 = vshrl.u32 %v605, 7
        %v607 = vsub.s32 2, %v606
        %v608 = vrot.slane %v420, %v607
        %v609 = vadd.f32 %v603, %v608
        %vm610 = vcmp.gt.f32.partialorder %v609, 0.0
        %v611 = vmul.f32 %v609, 0.2
        %v612 = vsel %vm610, %v609, %v611
        %v613 = vadd.f32 %v612, %v439
        %v614 = vsel %vm453, %v613, -inf
        %615 = vmax.xlane.f32.xlu0 %v614
        %v616 = vpop.xlane.xlu0 %615
        %v617 = vsub.f32 %v613, %v616
        %v618 = vmul.f32 %v617, 1.442695
        %v619 = vpow.pop %v618
        %v620 = vpack.c.bf16 %v619, %v619
        %v621 = vunpack.c.l.bf16 %v620
        %v622 = vsel %vm453, %v621, 0.0
        %623 = vadd.xlane.f32.xlu0 %v622
        %v624 = vpop.xlane.xlu0 %623
        %625 = vrot.lane.b32.xlu0 %v290, 64
        %v626 = vpop.permute.xlu0 %625
        %v628 = vsel %vm453, %v620, 0
        %v631 = vsel %vm468, %v626, 0
        %633 = vmatprep.subr.bf16.mxu0 0
        %634 = vmatpush1.bf16.msra.mxu0 0
        %635 = vmatprep.subr.bf16.mxu0 0
        %636 = vmatpush1.bf16.msra.mxu0 0
        %637 = vmatprep.subr.bf16.mxu0 0
        %638 = vmatpush1.bf16.msra.mxu0 0
        %639 = vmatprep.subr.bf16.mxu0 0
        %640 = vmatpush1.bf16.msra.mxu0 0
        %641 = vmatprep.subr.bf16.mxu0 0
        %642 = vmatpush1.bf16.msra.mxu0 0
        %643 = vmatprep.subr.bf16.mxu0 0
        %644 = vmatpush1.bf16.msra.mxu0 0
        %645 = vmatprep.subr.bf16.mxu0 0
        %646 = vmatpush1.bf16.msra.mxu0 0
        %647 = vmatprep.subr.bf16.mxu0 0
        %648 = vmatpush1.bf16.msra.mxu0 %v631
        %649 = vmatprep.subr.bf16.mxu0 0
        %650 = vmatpush2.bf16.msra.mxu0 0
        %651 = vmatprep.subr.bf16.mxu0 0
        %652 = vmatpush2.bf16.msra.mxu0 0
        %653 = vmatprep.subr.bf16.mxu0 0
        %654 = vmatpush2.bf16.msra.mxu0 0
        %655 = vmatprep.subr.bf16.mxu0 0
        %656 = vmatpush2.bf16.msra.mxu0 0
        %657 = vmatprep.subr.bf16.mxu0 0
        %658 = vmatpush2.bf16.msra.mxu0 0
        %659 = vmatprep.subr.bf16.mxu0 0
        %660 = vmatpush2.bf16.msra.mxu0 0
        %661 = vmatprep.subr.bf16.mxu0 0
        %662 = vmatpush2.bf16.msra.mxu0 0
        %663 = vmatprep.subr.bf16.mxu0 0
        %664 = vmatpush2.bf16.msra.mxu0 0
        %665 = vmatprep.mubr.bf16.mxu0 0
        %666 = vmatmul.mubr.bf16.gmra.mxu0 %v628
        %v667 = vpop.f32.mrf.mxu0
        %v668 = vadd.f32 0.0, %v667
        %v669 = vpop.f32.mrf.mxu0
        %v670 = vpop.f32.mrf.mxu0
        %v671 = vpop.f32.mrf.mxu0
        %672 = vdwg.mxu0
        %v673 = vrcp.pop %v624
        %v674 = vmul.f32 %v668, %v673
        %v675 = vmin.f32 %v674, 0.0
        %v676 = vmul.f32 %v675, 1.442695
        %v677 = vpow.pop %v676
        %v678 = vsub.f32 %v677, 1.0
        %vm679 = vcmp.gt.f32.partialorder %v674, 0.0
        %v680 = vsel %vm679, %v674, %v678
        %681 = vset.pattern.permute.xlu0 3
        %682 = vperm.xlu0 %681, %v390
        %v683 = vpop.permute.xlu0 %682
        %v685 = vlaneseq
        %v686 = vshrl.u32 %v685, 7
        %v687 = vsub.s32 3, %v686
        %v688 = vrot.slane %v420, %v687
        %v689 = vadd.f32 %v683, %v688
        %vm690 = vcmp.gt.f32.partialorder %v689, 0.0
        %v691 = vmul.f32 %v689, 0.2
        %v692 = vsel %vm690, %v689, %v691
        %v693 = vadd.f32 %v692, %v439
        %v694 = vsel %vm453, %v693, -inf
        %695 = vmax.xlane.f32.xlu0 %v694
        %v696 = vpop.xlane.xlu0 %695
        %v697 = vsub.f32 %v693, %v696
        %v698 = vmul.f32 %v697, 1.442695
        %v699 = vpow.pop %v698
        %v700 = vpack.c.bf16 %v699, %v699
        %v701 = vunpack.c.l.bf16 %v700
        %v702 = vsel %vm453, %v701, 0.0
        %703 = vadd.xlane.f32.xlu0 %v702
        %v704 = vpop.xlane.xlu0 %703
        %705 = vrot.lane.b32.xlu0 %v290, 32
        %v706 = vpop.permute.xlu0 %705
        %v708 = vsel %vm453, %v700, 0
        %v711 = vsel %vm468, %v706, 0
        %713 = vmatprep.subr.bf16.mxu0 0
        %714 = vmatpush1.bf16.msra.mxu0 0
        %715 = vmatprep.subr.bf16.mxu0 0
        %716 = vmatpush1.bf16.msra.mxu0 0
        %717 = vmatprep.subr.bf16.mxu0 0
        %718 = vmatpush1.bf16.msra.mxu0 0
        %719 = vmatprep.subr.bf16.mxu0 0
        %720 = vmatpush1.bf16.msra.mxu0 0
        %721 = vmatprep.subr.bf16.mxu0 0
        %722 = vmatpush1.bf16.msra.mxu0 0
        %723 = vmatprep.subr.bf16.mxu0 0
        %724 = vmatpush1.bf16.msra.mxu0 0
        %725 = vmatprep.subr.bf16.mxu0 0
        %726 = vmatpush1.bf16.msra.mxu0 0
        %727 = vmatprep.subr.bf16.mxu0 0
        %728 = vmatpush1.bf16.msra.mxu0 %v711
        %729 = vmatprep.subr.bf16.mxu0 0
        %730 = vmatpush2.bf16.msra.mxu0 0
        %731 = vmatprep.subr.bf16.mxu0 0
        %732 = vmatpush2.bf16.msra.mxu0 0
        %733 = vmatprep.subr.bf16.mxu0 0
        %734 = vmatpush2.bf16.msra.mxu0 0
        %735 = vmatprep.subr.bf16.mxu0 0
        %736 = vmatpush2.bf16.msra.mxu0 0
        %737 = vmatprep.subr.bf16.mxu0 0
        %738 = vmatpush2.bf16.msra.mxu0 0
        %739 = vmatprep.subr.bf16.mxu0 0
        %740 = vmatpush2.bf16.msra.mxu0 0
        %741 = vmatprep.subr.bf16.mxu0 0
        %742 = vmatpush2.bf16.msra.mxu0 0
        %743 = vmatprep.subr.bf16.mxu0 0
        %744 = vmatpush2.bf16.msra.mxu0 0
        %745 = vmatprep.mubr.bf16.mxu0 0
        %746 = vmatmul.mubr.bf16.gmra.mxu0 %v708
        %v747 = vpop.f32.mrf.mxu0
        %v748 = vadd.f32 0.0, %v747
        %v749 = vpop.f32.mrf.mxu0
        %v750 = vpop.f32.mrf.mxu0
        %v751 = vpop.f32.mrf.mxu0
        %752 = vdwg.mxu0
        %v753 = vrcp.pop %v704
        %v754 = vmul.f32 %v748, %v753
        %v755 = vmin.f32 %v754, 0.0
        %v756 = vmul.f32 %v755, 1.442695
        %v757 = vpow.pop %v756
        %v758 = vsub.f32 %v757, 1.0
        %vm759 = vcmp.gt.f32.partialorder %v754, 0.0
        %v760 = vsel %vm759, %v754, %v758
        %762 = vrot.lane.b32.xlu0 %v600, 32
        %v763 = vpop.permute.xlu0 %762
        %766 = vrot.lane.b32.xlu0 %v680, 64
        %v767 = vpop.permute.xlu0 %766
        %770 = vrot.lane.b32.xlu0 %v760, 96
        %v771 = vpop.permute.xlu0 %770
        %v773 = vsel %vm245, %v519, %v763
        %vm774 = vcmask 523264
        %v775 = vsel %vm774, %v773, %v767
        %vm776 = vcmask 785408
        %v777 = vsel %vm776, %v775, %v771
        %s778 = scalar_lea.vmem %s218, 2
        %v779 = vld [vmem:[%s778] sm:$0x3]
        %v780 = vunpack.c.0.s8 %v779
        %vm781 = vcmp.gt.s32.totalorder %v780, 0
        %v782 = vsel %vm781, 0.0, -9e+15
        %783 = vset.pattern.permute.xlu0 0
        %784 = vperm.xlu0 %783, %v393
        %v785 = vpop.permute.xlu0 %784
        %v787 = vadd.f32 %v785, %v447
        %vm788 = vcmp.gt.f32.partialorder %v787, 0.0
        %v789 = vmul.f32 %v787, 0.2
        %v790 = vsel %vm788, %v787, %v789
        %792 = vrot.lane.b32.xlu0 %v782, 8
        %v793 = vpop.permute.xlu0 %792
        %v795 = vadd.f32 %v790, %v793
        %vm796 = vcmask 130112
        %v797 = vsel %vm796, %v795, -inf
        %798 = vmax.xlane.f32.xlu0 %v797
        %v799 = vpop.xlane.xlu0 %798
        %v800 = vsub.f32 %v795, %v799
        %v801 = vmul.f32 %v800, 1.442695
        %v802 = vpow.pop %v801
        %v803 = vpack.c.bf16 %v802, %v802
        %v804 = vunpack.c.l.bf16 %v803
        %806 = vrot.lane.b32.xlu0 %v804, 120
        %v807 = vpop.permute.xlu0 %806
        %v809 = vsel %vm453, %v807, 0.0
        %810 = vadd.xlane.f32.xlu0 %v809
        %v811 = vpop.xlane.xlu0 %810
        %813 = vrot.lane.b32.xlu0 %v803, 120
        %v814 = vpop.permute.xlu0 %813
        %v815 = vrot.slane %v290, 4
        %v817 = vsel %vm453, %v814, 0
        %v820 = vsel %vm468, %v815, 0
        %822 = vmatprep.subr.bf16.mxu0 0
        %823 = vmatpush1.bf16.msra.mxu0 0
        %824 = vmatprep.subr.bf16.mxu0 0
        %825 = vmatpush1.bf16.msra.mxu0 0
        %826 = vmatprep.subr.bf16.mxu0 0
        %827 = vmatpush1.bf16.msra.mxu0 0
        %828 = vmatprep.subr.bf16.mxu0 0
        %829 = vmatpush1.bf16.msra.mxu0 0
        %830 = vmatprep.subr.bf16.mxu0 0
        %831 = vmatpush1.bf16.msra.mxu0 0
        %832 = vmatprep.subr.bf16.mxu0 0
        %833 = vmatpush1.bf16.msra.mxu0 0
        %834 = vmatprep.subr.bf16.mxu0 0
        %835 = vmatpush1.bf16.msra.mxu0 0
        %836 = vmatprep.subr.bf16.mxu0 0
        %837 = vmatpush1.bf16.msra.mxu0 %v820
        %838 = vmatprep.subr.bf16.mxu0 0
        %839 = vmatpush2.bf16.msra.mxu0 0
        %840 = vmatprep.subr.bf16.mxu0 0
        %841 = vmatpush2.bf16.msra.mxu0 0
        %842 = vmatprep.subr.bf16.mxu0 0
        %843 = vmatpush2.bf16.msra.mxu0 0
        %844 = vmatprep.subr.bf16.mxu0 0
        %845 = vmatpush2.bf16.msra.mxu0 0
        %846 = vmatprep.subr.bf16.mxu0 0
        %847 = vmatpush2.bf16.msra.mxu0 0
        %848 = vmatprep.subr.bf16.mxu0 0
        %849 = vmatpush2.bf16.msra.mxu0 0
        %850 = vmatprep.subr.bf16.mxu0 0
        %851 = vmatpush2.bf16.msra.mxu0 0
        %852 = vmatprep.subr.bf16.mxu0 0
        %853 = vmatpush2.bf16.msra.mxu0 0
        %854 = vmatprep.mubr.bf16.mxu0 0
        %855 = vmatmul.mubr.bf16.gmra.mxu0 %v817
        %v856 = vpop.f32.mrf.mxu0
        %v857 = vadd.f32 0.0, %v856
        %v858 = vpop.f32.mrf.mxu0
        %v859 = vpop.f32.mrf.mxu0
        %v860 = vpop.f32.mrf.mxu0
        %861 = vdwg.mxu0
        %v862 = vrcp.pop %v811
        %v863 = vmul.f32 %v857, %v862
        %v864 = vmin.f32 %v863, 0.0
        %v865 = vmul.f32 %v864, 1.442695
        %v866 = vpow.pop %v865
        %v867 = vsub.f32 %v866, 1.0
        %vm868 = vcmp.gt.f32.partialorder %v863, 0.0
        %v869 = vsel %vm868, %v863, %v867
        %870 = vset.pattern.permute.xlu0 1
        %871 = vperm.xlu0 %870, %v393
        %v872 = vpop.permute.xlu0 %871
        %v874 = vadd.f32 %v872, %v527
        %vm875 = vcmp.gt.f32.partialorder %v874, 0.0
        %v876 = vmul.f32 %v874, 0.2
        %v877 = vsel %vm875, %v874, %v876
        %v878 = vadd.f32 %v877, %v793
        %v879 = vsel %vm796, %v878, -inf
        %880 = vmax.xlane.f32.xlu0 %v879
        %v881 = vpop.xlane.xlu0 %880
        %v882 = vsub.f32 %v878, %v881
        %v883 = vmul.f32 %v882, 1.442695
        %v884 = vpow.pop %v883
        %v885 = vpack.c.bf16 %v884, %v884
        %v886 = vunpack.c.l.bf16 %v885
        %888 = vrot.lane.b32.xlu0 %v886, 120
        %v889 = vpop.permute.xlu0 %888
        %v891 = vsel %vm453, %v889, 0.0
        %892 = vadd.xlane.f32.xlu0 %v891
        %v893 = vpop.xlane.xlu0 %892
        %895 = vrot.lane.b32.xlu0 %v885, 120
        %v896 = vpop.permute.xlu0 %895
        %897 = vrot.lane.b32.xlu0 %v815, 96
        %v898 = vpop.permute.xlu0 %897
        %v900 = vsel %vm453, %v896, 0
        %v903 = vsel %vm468, %v898, 0
        %905 = vmatprep.subr.bf16.mxu0 0
        %906 = vmatpush1.bf16.msra.mxu0 0
        %907 = vmatprep.subr.bf16.mxu0 0
        %908 = vmatpush1.bf16.msra.mxu0 0
        %909 = vmatprep.subr.bf16.mxu0 0
        %910 = vmatpush1.bf16.msra.mxu0 0
        %911 = vmatprep.subr.bf16.mxu0 0
        %912 = vmatpush1.bf16.msra.mxu0 0
        %913 = vmatprep.subr.bf16.mxu0 0
        %914 = vmatpush1.bf16.msra.mxu0 0
        %915 = vmatprep.subr.bf16.mxu0 0
        %916 = vmatpush1.bf16.msra.mxu0 0
        %917 = vmatprep.subr.bf16.mxu0 0
        %918 = vmatpush1.bf16.msra.mxu0 0
        %919 = vmatprep.subr.bf16.mxu0 0
        %920 = vmatpush1.bf16.msra.mxu0 %v903
        %921 = vmatprep.subr.bf16.mxu0 0
        %922 = vmatpush2.bf16.msra.mxu0 0
        %923 = vmatprep.subr.bf16.mxu0 0
        %924 = vmatpush2.bf16.msra.mxu0 0
        %925 = vmatprep.subr.bf16.mxu0 0
        %926 = vmatpush2.bf16.msra.mxu0 0
        %927 = vmatprep.subr.bf16.mxu0 0
        %928 = vmatpush2.bf16.msra.mxu0 0
        %929 = vmatprep.subr.bf16.mxu0 0
        %930 = vmatpush2.bf16.msra.mxu0 0
        %931 = vmatprep.subr.bf16.mxu0 0
        %932 = vmatpush2.bf16.msra.mxu0 0
        %933 = vmatprep.subr.bf16.mxu0 0
        %934 = vmatpush2.bf16.msra.mxu0 0
        %935 = vmatprep.subr.bf16.mxu0 0
        %936 = vmatpush2.bf16.msra.mxu0 0
        %937 = vmatprep.mubr.bf16.mxu0 0
        %938 = vmatmul.mubr.bf16.gmra.mxu0 %v900
        %v939 = vpop.f32.mrf.mxu0
        %v940 = vadd.f32 0.0, %v939
        %v941 = vpop.f32.mrf.mxu0
        %v942 = vpop.f32.mrf.mxu0
        %v943 = vpop.f32.mrf.mxu0
        %944 = vdwg.mxu0
        %v945 = vrcp.pop %v893
        %v946 = vmul.f32 %v940, %v945
        %v947 = vmin.f32 %v946, 0.0
        %v948 = vmul.f32 %v947, 1.442695
        %v949 = vpow.pop %v948
        %v950 = vsub.f32 %v949, 1.0
        %vm951 = vcmp.gt.f32.partialorder %v946, 0.0
        %v952 = vsel %vm951, %v946, %v950
        %953 = vset.pattern.permute.xlu0 2
        %954 = vperm.xlu0 %953, %v393
        %v955 = vpop.permute.xlu0 %954
        %v957 = vadd.f32 %v955, %v608
        %vm958 = vcmp.gt.f32.partialorder %v957, 0.0
        %v959 = vmul.f32 %v957, 0.2
        %v960 = vsel %vm958, %v957, %v959
        %v961 = vadd.f32 %v960, %v793
        %v962 = vsel %vm796, %v961, -inf
        %963 = vmax.xlane.f32.xlu0 %v962
        %v964 = vpop.xlane.xlu0 %963
        %v965 = vsub.f32 %v961, %v964
        %v966 = vmul.f32 %v965, 1.442695
        %v967 = vpow.pop %v966
        %v968 = vpack.c.bf16 %v967, %v967
        %v969 = vunpack.c.l.bf16 %v968
        %971 = vrot.lane.b32.xlu0 %v969, 120
        %v972 = vpop.permute.xlu0 %971
        %v974 = vsel %vm453, %v972, 0.0
        %975 = vadd.xlane.f32.xlu0 %v974
        %v976 = vpop.xlane.xlu0 %975
        %978 = vrot.lane.b32.xlu0 %v968, 120
        %v979 = vpop.permute.xlu0 %978
        %980 = vrot.lane.b32.xlu0 %v815, 64
        %v981 = vpop.permute.xlu0 %980
        %v983 = vsel %vm453, %v979, 0
        %v986 = vsel %vm468, %v981, 0
        %988 = vmatprep.subr.bf16.mxu0 0
        %989 = vmatpush1.bf16.msra.mxu0 0
        %990 = vmatprep.subr.bf16.mxu0 0
        %991 = vmatpush1.bf16.msra.mxu0 0
        %992 = vmatprep.subr.bf16.mxu0 0
        %993 = vmatpush1.bf16.msra.mxu0 0
        %994 = vmatprep.subr.bf16.mxu0 0
        %995 = vmatpush1.bf16.msra.mxu0 0
        %996 = vmatprep.subr.bf16.mxu0 0
        %997 = vmatpush1.bf16.msra.mxu0 0
        %998 = vmatprep.subr.bf16.mxu0 0
        %999 = vmatpush1.bf16.msra.mxu0 0
        %1000 = vmatprep.subr.bf16.mxu0 0
        %1001 = vmatpush1.bf16.msra.mxu0 0
        %1002 = vmatprep.subr.bf16.mxu0 0
        %1003 = vmatpush1.bf16.msra.mxu0 %v986
        %1004 = vmatprep.subr.bf16.mxu0 0
        %1005 = vmatpush2.bf16.msra.mxu0 0
        %1006 = vmatprep.subr.bf16.mxu0 0
        %1007 = vmatpush2.bf16.msra.mxu0 0
        %1008 = vmatprep.subr.bf16.mxu0 0
        %1009 = vmatpush2.bf16.msra.mxu0 0
        %1010 = vmatprep.subr.bf16.mxu0 0
        %1011 = vmatpush2.bf16.msra.mxu0 0
        %1012 = vmatprep.subr.bf16.mxu0 0
        %1013 = vmatpush2.bf16.msra.mxu0 0
        %1014 = vmatprep.subr.bf16.mxu0 0
        %1015 = vmatpush2.bf16.msra.mxu0 0
        %1016 = vmatprep.subr.bf16.mxu0 0
        %1017 = vmatpush2.bf16.msra.mxu0 0
        %1018 = vmatprep.subr.bf16.mxu0 0
        %1019 = vmatpush2.bf16.msra.mxu0 0
        %1020 = vmatprep.mubr.bf16.mxu0 0
        %1021 = vmatmul.mubr.bf16.gmra.mxu0 %v983
        %v1022 = vpop.f32.mrf.mxu0
        %v1023 = vadd.f32 0.0, %v1022
        %v1024 = vpop.f32.mrf.mxu0
        %v1025 = vpop.f32.mrf.mxu0
        %v1026 = vpop.f32.mrf.mxu0
        %1027 = vdwg.mxu0
        %v1028 = vrcp.pop %v976
        %v1029 = vmul.f32 %v1023, %v1028
        %v1030 = vmin.f32 %v1029, 0.0
        %v1031 = vmul.f32 %v1030, 1.442695
        %v1032 = vpow.pop %v1031
        %v1033 = vsub.f32 %v1032, 1.0
        %vm1034 = vcmp.gt.f32.partialorder %v1029, 0.0
        %v1035 = vsel %vm1034, %v1029, %v1033
        %1036 = vset.pattern.permute.xlu0 3
        %1037 = vperm.xlu0 %1036, %v393
        %v1038 = vpop.permute.xlu0 %1037
        %v1040 = vadd.f32 %v1038, %v688
        %vm1041 = vcmp.gt.f32.partialorder %v1040, 0.0
        %v1042 = vmul.f32 %v1040, 0.2
        %v1043 = vsel %vm1041, %v1040, %v1042
        %v1044 = vadd.f32 %v1043, %v793
        %v1045 = vsel %vm796, %v1044, -inf
        %1046 = vmax.xlane.f32.xlu0 %v1045
        %v1047 = vpop.xlane.xlu0 %1046
        %v1048 = vsub.f32 %v1044, %v1047
        %v1049 = vmul.f32 %v1048, 1.442695
        %v1050 = vpow.pop %v1049
        %v1051 = vpack.c.bf16 %v1050, %v1050
        %v1052 = vunpack.c.l.bf16 %v1051
        %1054 = vrot.lane.b32.xlu0 %v1052, 120
        %v1055 = vpop.permute.xlu0 %1054
        %v1057 = vsel %vm453, %v1055, 0.0
        %1058 = vadd.xlane.f32.xlu0 %v1057
        %v1059 = vpop.xlane.xlu0 %1058
        %1061 = vrot.lane.b32.xlu0 %v1051, 120
        %v1062 = vpop.permute.xlu0 %1061
        %1063 = vrot.lane.b32.xlu0 %v815, 32
        %v1064 = vpop.permute.xlu0 %1063
        %v1066 = vsel %vm453, %v1062, 0
        %v1069 = vsel %vm468, %v1064, 0
        %1071 = vmatprep.subr.bf16.mxu0 0
        %1072 = vmatpush1.bf16.msra.mxu0 0
        %1073 = vmatprep.subr.bf16.mxu0 0
        %1074 = vmatpush1.bf16.msra.mxu0 0
        %1075 = vmatprep.subr.bf16.mxu0 0
        %1076 = vmatpush1.bf16.msra.mxu0 0
        %1077 = vmatprep.subr.bf16.mxu0 0
        %1078 = vmatpush1.bf16.msra.mxu0 0
        %1079 = vmatprep.subr.bf16.mxu0 0
        %1080 = vmatpush1.bf16.msra.mxu0 0
        %1081 = vmatprep.subr.bf16.mxu0 0
        %1082 = vmatpush1.bf16.msra.mxu0 0
        %1083 = vmatprep.subr.bf16.mxu0 0
        %1084 = vmatpush1.bf16.msra.mxu0 0
        %1085 = vmatprep.subr.bf16.mxu0 0
        %1086 = vmatpush1.bf16.msra.mxu0 %v1069
        %1087 = vmatprep.subr.bf16.mxu0 0
        %1088 = vmatpush2.bf16.msra.mxu0 0
        %1089 = vmatprep.subr.bf16.mxu0 0
        %1090 = vmatpush2.bf16.msra.mxu0 0
        %1091 = vmatprep.subr.bf16.mxu0 0
        %1092 = vmatpush2.bf16.msra.mxu0 0
        %1093 = vmatprep.subr.bf16.mxu0 0
        %1094 = vmatpush2.bf16.msra.mxu0 0
        %1095 = vmatprep.subr.bf16.mxu0 0
        %1096 = vmatpush2.bf16.msra.mxu0 0
        %1097 = vmatprep.subr.bf16.mxu0 0
        %1098 = vmatpush2.bf16.msra.mxu0 0
        %1099 = vmatprep.subr.bf16.mxu0 0
        %1100 = vmatpush2.bf16.msra.mxu0 0
        %1101 = vmatprep.subr.bf16.mxu0 0
        %1102 = vmatpush2.bf16.msra.mxu0 0
        %1103 = vmatprep.mubr.bf16.mxu0 0
        %1104 = vmatmul.mubr.bf16.gmra.mxu0 %v1066
        %v1105 = vpop.f32.mrf.mxu0
        %v1106 = vadd.f32 0.0, %v1105
        %v1107 = vpop.f32.mrf.mxu0
        %v1108 = vpop.f32.mrf.mxu0
        %v1109 = vpop.f32.mrf.mxu0
        %1110 = vdwg.mxu0
        %v1111 = vrcp.pop %v1059
        %v1112 = vmul.f32 %v1106, %v1111
        %v1113 = vmin.f32 %v1112, 0.0
        %v1114 = vmul.f32 %v1113, 1.442695
        %v1115 = vpow.pop %v1114
        %v1116 = vsub.f32 %v1115, 1.0
        %vm1117 = vcmp.gt.f32.partialorder %v1112, 0.0
        %v1118 = vsel %vm1117, %v1112, %v1116
        %1120 = vrot.lane.b32.xlu0 %v952, 32
        %v1121 = vpop.permute.xlu0 %1120
        %1124 = vrot.lane.b32.xlu0 %v1035, 64
        %v1125 = vpop.permute.xlu0 %1124
        %1128 = vrot.lane.b32.xlu0 %v1118, 96
        %v1129 = vpop.permute.xlu0 %1128
        %v1131 = vsel %vm245, %v869, %v1121
        %v1132 = vsel %vm774, %v1131, %v1125
        %v1133 = vsel %vm776, %v1132, %v1129
        %1134 = vst [vmem:[%s207] sm:$0xff] %v777
        %1135 = vst [vmem:[%s207 + $0x8] sm:$0xff] %v1133
        %s1136 = sand.u32 %s120, 1
        %s1137 = scalar_lea.sflag [#allocation3], %s1136
        %s1138 = sand.u32 %s120, 1
        %s1139 = smul.addr %s1138, 16
        %s1140 = scalar_lea.vmem [#allocation2], %s1139
        // Predicated region
        $region37: #{gat_forward.1} parent=35 // pred_check
          %p1141 = pneg %p130
        $region38: #{gat_forward.1} parent=35 // pred_check_branch
          %1143 = sbr.rel (%p1141) target = $region40
        $region39: #{gat_forward.1} parent=35 // pred_region
          %s1144 = smul.u32 2, %s18
          %s1146 = ssub.s32 256, 256
          %1147 = vsyncadd %s1137, %s1146
          %s1148 = smul.addr %s1144, 128
          %s1149 = scalar_lea.hbm %s4, %s1148
          %s1150 = sshll.u32 %s1140, 4
          %s1151 = int_to_ptr.vmem [resolvable:$true] %s1150
          %1156 = dma.vmem_to_hbm [thread:$0]  %s1151, 256, %s1149, %s1137, 128, 128, 8
        $region40: #{gat_forward.1} parent=35 // pred_fallthru
          _
      $region36: #{gat_forward.1} parent=5 // pred_fallthru
        _
      %p1157 = scmp.le.s32.totalorder 2, %s13
      // Predicated region
      $region41: #{gat_forward.1} parent=5 // pred_check
        %p1158 = pneg %p1157
      $region42: #{gat_forward.1} parent=5 // pred_check_branch
        %1160 = sbr.rel (%p1158) target = $region44
      $region43: #{gat_forward.1} parent=5 // pred_region
        %s1161 = ssub.s32 %s13, 2
        // Predicated region
        $region45: #{gat_forward.1} parent=43 // pred_check
          %p1162 = pneg %p136
        $region46: #{gat_forward.1} parent=43 // pred_check_branch
          %1164 = sbr.rel (%p1162) target = $region48
        $region47: #{gat_forward.1} parent=43 // pred_region
          %s1165 = sand.u32 %s121, 1
          %s1166 = scalar_lea.sflag [#allocation3], %s1165
          %s1167 = sand.u32 %s121, 1
          %s1168 = smul.addr %s1167, 16
          %s1169 = scalar_lea.vmem [#allocation2], %s1168
          %1170 = dma.done %s1166, 256
        $region48: #{gat_forward.1} parent=43 // pred_fallthru
          _
      $region44: #{gat_forward.1} parent=5 // pred_fallthru
        _
    $region6: #{gat_forward.1} parent=1 // loop_footer
      %s17 = sadd.s32 1, %s13
    $region7: #{gat_forward.1} parent=1 // loop_footer_branch
      %12 = sbr.rel target = $region3
    $region8: #{gat_forward.1} parent=1 // loop_exit
      _
    %1171 = vsyncpa [#allocation3], 1
    %s1172 = scalar_lea.sflag [#allocation3], 1
    %1173 = vsyncpa %s1172, 1

</llo_original>
